<compile_context>
chip_gen: v7x
topology: tpu7x:2x2x1
jax: 0.10.0
libtpu: 0.0.40
codegen_flags: <defaults>
</compile_context>

<pallas_src>
import jax
import jax.numpy as jnp
from jax.experimental import pallas as pl
from jax.experimental.pallas import tpu as pltpu

K_IN = 100          # true latent dim
K_PAD = 128         # padded contraction dim for layer 1
H1, H2 = 256, 512   # hidden widths
OUT = 28 * 28       # 784
OUT_PAD = 896       # 784 padded up to a multiple of 128


def _round_up(x, m):
    return ((x + m - 1) // m) * m


def generator_kernel(x_ref, w1_ref, b1_ref, w2_ref, b2_ref, w3_ref, b3_ref, o_ref):
    # x_ref: (TB, 128) f32 (zero-padded latent).  Weights are bf16, biases f32.
    # Cast activations to bf16 only at the MXU inputs; accumulate in f32.
    x = x_ref[...]

    # Linear(100->256) + ReLU   (K padded to 128; padded w1 rows are zero)
    h1 = jnp.dot(x.astype(jnp.bfloat16), w1_ref[...],
                 preferred_element_type=jnp.float32)
    h1 = jnp.maximum(h1 + b1_ref[...], 0.0)

    # Linear(256->512) + ReLU
    h2 = jnp.dot(h1.astype(jnp.bfloat16), w2_ref[...],
                 preferred_element_type=jnp.float32)
    h2 = jnp.maximum(h2 + b2_ref[...], 0.0)

    # Linear(512->784) + Tanh   (N padded to 896; padded w3/b3 cols are zero)
    h3 = jnp.dot(h2.astype(jnp.bfloat16), w3_ref[...],
                 preferred_element_type=jnp.float32)
    o_ref[...] = jnp.tanh(h3 + b3_ref[...])


def generator_forward(x, params):
    """x: (B, 100) float32 -> (B, 1, 28, 28) float32, matching PyTorch Generator."""
    w1, b1, w2, b2, w3, b3 = params
    B = x.shape[0]

    # Batch tile: 128 rows for real workloads, else the (8-aligned) whole batch.
    TB = 128 if B >= 128 else _round_up(B, 8)
    B_pad = _round_up(B, TB)

    # Zero-pad latent to (B_pad, 128) once, outside the hot path.
    x_pad = jnp.zeros((B_pad, K_PAD), jnp.float32).at[:B, :K_IN].set(x)

    grid = (B_pad // TB,)
    out_pad = pl.pallas_call(
        generator_kernel,
        out_shape=jax.ShapeDtypeStruct((B_pad, OUT_PAD), jnp.float32),
        grid_spec=pltpu.PrefetchScalarGridSpec(
            num_scalar_prefetch=0,
            grid=grid,
            in_specs=[
                # batch-tiled activations
                pl.BlockSpec((TB, K_PAD), lambda i: (i, 0)),
                # weights/biases: constant index_map -> fetched once, VMEM-resident
                pl.BlockSpec((K_PAD, H1), lambda i: (0, 0)),
                pl.BlockSpec((1, H1), lambda i: (0, 0)),
                pl.BlockSpec((H1, H2), lambda i: (0, 0)),
                pl.BlockSpec((1, H2), lambda i: (0, 0)),
                pl.BlockSpec((H2, OUT_PAD), lambda i: (0, 0)),
                pl.BlockSpec((1, OUT_PAD), lambda i: (0, 0)),
            ],
            out_specs=pl.BlockSpec((TB, OUT_PAD), lambda i: (i, 0)),
        ),
        compiler_params=pltpu.CompilerParams(
            # batch tiles are independent -> shard across v7x's 2 TensorCores
            dimension_semantics=("parallel",),
        ),
    )(x_pad, w1, b1, w2, b2, w3, b3)

    # Drop batch / lane padding, then PyTorch's img.view(-1, 1, 28, 28) (NCHW).
    return out_pad[:B, :OUT].reshape(B, 1, 28, 28)


def init_params(key):
    """Deterministic parameter init matching the module's layer shapes.

    PyTorch nn.Linear stores weight as (out, in); we store the transposed
    (in, out) layout so the kernel can do x @ W directly (same math).
    Weights are stored bf16 (HBM-bandwidth win), zero-padded to tile-aligned
    shapes: w1 (100->128 rows), w3/b3 (784->896 cols). Biases stay f32.
    """
    k1, k2, k3, k4, k5, k6 = jax.random.split(key, 6)
    w1 = jax.random.normal(k1, (K_IN, H1), jnp.float32) * 0.05
    b1 = jax.random.normal(k2, (1, H1), jnp.float32) * 0.05
    w2 = jax.random.normal(k3, (H1, H2), jnp.float32) * 0.05
    b2 = jax.random.normal(k4, (1, H2), jnp.float32) * 0.05
    w3 = jax.random.normal(k5, (H2, OUT), jnp.float32) * 0.05
    b3 = jax.random.normal(k6, (1, OUT), jnp.float32) * 0.05

    w1_p = jnp.zeros((K_PAD, H1), jnp.float32).at[:K_IN, :].set(w1).astype(jnp.bfloat16)
    w2_p = w2.astype(jnp.bfloat16)
    w3_p = jnp.zeros((H2, OUT_PAD), jnp.float32).at[:, :OUT].set(w3).astype(jnp.bfloat16)
    b3_p = jnp.zeros((1, OUT_PAD), jnp.float32).at[:, :OUT].set(b3)
    # TODO(synk): on v7x only, w2/w3 could additionally be stored fp8 (e4m3) with a
    # per-tensor scale for another ~2x cut in weight DMA (not portable to v5e/v6e).
    return (w1_p, b1, w2_p, b2, w3_p, b3_p)


if __name__ == "__main__":
    key = jax.random.PRNGKey(0)
    pkey, xkey = jax.random.split(key)
    params = init_params(pkey)

    B = 8  # small batch for the sanity check
    x = jax.random.normal(xkey, (B, K_IN), jnp.float32)

    img = generator_forward(x, params)
    img = jax.block_until_ready(img)

    # Pure-JAX reference using the same bf16 weights / f32 accumulation.
    w1, b1, w2, b2, w3, b3 = params
    x_pad = jnp.zeros((B, K_PAD), jnp.float32).at[:, :K_IN].set(x)
    h1 = jnp.maximum(
        jnp.dot(x_pad.astype(jnp.bfloat16), w1, preferred_element_type=jnp.float32) + b1, 0.0)
    h2 = jnp.maximum(
        jnp.dot(h1.astype(jnp.bfloat16), w2, preferred_element_type=jnp.float32) + b2, 0.0)
    h3 = jnp.tanh(
        jnp.dot(h2.astype(jnp.bfloat16), w3, preferred_element_type=jnp.float32) + b3)
    ref = h3[:, :OUT].reshape(B, 1, 28, 28)

    assert img.shape == (B, 1, 28, 28)
    assert jnp.allclose(img, ref, atol=2e-3, rtol=2e-3), float(jnp.max(jnp.abs(img - ref)))

    print("KERNEL_OK")
</pallas_src>

<mosaic_0001>
module attributes {stable_mosaic.version = 11 : i64} {
  func.func @generator_kernel(%arg0: i32, %arg1: memref<8x128xf32, #tpu.memory_space<vmem>>, %arg2: memref<128x256xbf16, #tpu.memory_space<vmem>>, %arg3: memref<1x256xf32, #tpu.memory_space<vmem>>, %arg4: memref<256x512xbf16, #tpu.memory_space<vmem>>, %arg5: memref<1x512xf32, #tpu.memory_space<vmem>>, %arg6: memref<512x896xbf16, #tpu.memory_space<vmem>>, %arg7: memref<1x896xf32, #tpu.memory_space<vmem>>, %arg8: memref<8x896xf32, #tpu.memory_space<vmem>>) attributes {dimension_semantics = [#tpu.dimension_semantics<parallel>], iteration_bounds = array<i64: 1>, scalar_prefetch = 0 : i64, scratch_operands = 0 : i64, tpu.core_type = #tpu.core_type<tc>, window_params = [{transform_indices = @transform_0, window_bounds = array<i64: 8, 128>}, {pipeline_mode = #tpu.pipeline_mode<synchronous>, transform_indices = @transform_1, window_bounds = array<i64: 128, 256>}, {pipeline_mode = #tpu.pipeline_mode<synchronous>, transform_indices = @transform_2, window_bounds = array<i64: 1, 256>}, {pipeline_mode = #tpu.pipeline_mode<synchronous>, transform_indices = @transform_3, window_bounds = array<i64: 256, 512>}, {pipeline_mode = #tpu.pipeline_mode<synchronous>, transform_indices = @transform_4, window_bounds = array<i64: 1, 512>}, {pipeline_mode = #tpu.pipeline_mode<synchronous>, transform_indices = @transform_5, window_bounds = array<i64: 512, 896>}, {pipeline_mode = #tpu.pipeline_mode<synchronous>, transform_indices = @transform_6, window_bounds = array<i64: 1, 896>}, {transform_indices = @transform_7, window_bounds = array<i64: 8, 896>}]} {
    %c0 = arith.constant 0 : index
    %c0_0 = arith.constant 0 : index
    %0 = vector.load %arg1[%c0, %c0_0] : memref<8x128xf32, #tpu.memory_space<vmem>>, vector<8x128xf32>
    %1 = arith.truncf %0 : vector<8x128xf32> to vector<8x128xbf16>
    %c0_1 = arith.constant 0 : index
    %c0_2 = arith.constant 0 : index
    %2 = vector.load %arg2[%c0_1, %c0_2] : memref<128x256xbf16, #tpu.memory_space<vmem>>, vector<128x256xbf16>
    %cst = arith.constant dense<0.000000e+00> : vector<8x256xf32>
    %3 = tpu.matmul %1, %2, %cst {dimension_numbers = #tpu.dot_dimension_numbers<[1], [0], [0], [1], [0, 0, 1, 1], [], []>} : vector<8x128xbf16>, vector<128x256xbf16>, vector<8x256xf32> -> vector<8x256xf32>
    %c0_3 = arith.constant 0 : index
    %c0_4 = arith.constant 0 : index
    %4 = vector.load %arg3[%c0_3, %c0_4] : memref<1x256xf32, #tpu.memory_space<vmem>>, vector<1x256xf32>
    %5 = vector.broadcast %4 : vector<1x256xf32> to vector<8x256xf32>
    %6 = arith.addf %3, %5 : vector<8x256xf32>
    %cst_5 = arith.constant 0.000000e+00 : f32
    %7 = vector.broadcast %cst_5 : f32 to vector<8x256xf32>
    %8 = arith.maximumf %6, %7 : vector<8x256xf32>
    %9 = arith.truncf %8 : vector<8x256xf32> to vector<8x256xbf16>
    %c0_6 = arith.constant 0 : index
    %c0_7 = arith.constant 0 : index
    %10 = vector.load %arg4[%c0_6, %c0_7] : memref<256x512xbf16, #tpu.memory_space<vmem>>, vector<256x512xbf16>
    %cst_8 = arith.constant dense<0.000000e+00> : vector<8x512xf32>
    %11 = tpu.matmul %9, %10, %cst_8 {dimension_numbers = #tpu.dot_dimension_numbers<[1], [0], [0], [1], [0, 0, 1, 1], [], []>} : vector<8x256xbf16>, vector<256x512xbf16>, vector<8x512xf32> -> vector<8x512xf32>
    %c0_9 = arith.constant 0 : index
    %c0_10 = arith.constant 0 : index
    %12 = vector.load %arg5[%c0_9, %c0_10] : memref<1x512xf32, #tpu.memory_space<vmem>>, vector<1x512xf32>
    %13 = vector.broadcast %12 : vector<1x512xf32> to vector<8x512xf32>
    %14 = arith.addf %11, %13 : vector<8x512xf32>
    %cst_11 = arith.constant 0.000000e+00 : f32
    %15 = vector.broadcast %cst_11 : f32 to vector<8x512xf32>
    %16 = arith.maximumf %14, %15 : vector<8x512xf32>
    %17 = arith.truncf %16 : vector<8x512xf32> to vector<8x512xbf16>
    %c0_12 = arith.constant 0 : index
    %c0_13 = arith.constant 0 : index
    %18 = vector.load %arg6[%c0_12, %c0_13] : memref<512x896xbf16, #tpu.memory_space<vmem>>, vector<512x896xbf16>
    %cst_14 = arith.constant dense<0.000000e+00> : vector<8x896xf32>
    %19 = tpu.matmul %17, %18, %cst_14 {dimension_numbers = #tpu.dot_dimension_numbers<[1], [0], [0], [1], [0, 0, 1, 1], [], []>} : vector<8x512xbf16>, vector<512x896xbf16>, vector<8x896xf32> -> vector<8x896xf32>
    %c0_15 = arith.constant 0 : index
    %c0_16 = arith.constant 0 : index
    %20 = vector.load %arg7[%c0_15, %c0_16] : memref<1x896xf32, #tpu.memory_space<vmem>>, vector<1x896xf32>
    %21 = vector.broadcast %20 : vector<1x896xf32> to vector<8x896xf32>
    %22 = arith.addf %19, %21 : vector<8x896xf32>
    %23 = math.tanh %22 : vector<8x896xf32>
    %c0_17 = arith.constant 0 : index
    %c0_18 = arith.constant 0 : index
    %24 = vector.load %arg8[%c0_17, %c0_18] : memref<8x896xf32, #tpu.memory_space<vmem>>, vector<8x896xf32>
    tpu.vector_store %arg8[%c0_17, %c0_18], %23 {strides = array<i32>} : memref<8x896xf32, #tpu.memory_space<vmem>>, vector<8x896xf32>,
    return
  }
  func.func @transform_0(%arg0: i32) -> (i32, i32) {
    %c0_i32 = arith.constant 0 : i32
    %c0_i32_0 = arith.constant 0 : i32
    return %arg0, %c0_i32 : i32, i32
  }
  func.func @transform_1(%arg0: i32) -> (i32, i32) {
    %c0_i32 = arith.constant 0 : i32
    %c0_i32_0 = arith.constant 0 : i32
    %c0_i32_1 = arith.constant 0 : i32
    return %c0_i32, %c0_i32_0 : i32, i32
  }
  func.func @transform_2(%arg0: i32) -> (i32, i32) {
    %c0_i32 = arith.constant 0 : i32
    %c0_i32_0 = arith.constant 0 : i32
    %c0_i32_1 = arith.constant 0 : i32
    return %c0_i32, %c0_i32_0 : i32, i32
  }
  func.func @transform_3(%arg0: i32) -> (i32, i32) {
    %c0_i32 = arith.constant 0 : i32
    %c0_i32_0 = arith.constant 0 : i32
    %c0_i32_1 = arith.constant 0 : i32
    return %c0_i32, %c0_i32_0 : i32, i32
  }
  func.func @transform_4(%arg0: i32) -> (i32, i32) {
    %c0_i32 = arith.constant 0 : i32
    %c0_i32_0 = arith.constant 0 : i32
    %c0_i32_1 = arith.constant 0 : i32
    return %c0_i32, %c0_i32_0 : i32, i32
  }
  func.func @transform_5(%arg0: i32) -> (i32, i32) {
    %c0_i32 = arith.constant 0 : i32
    %c0_i32_0 = arith.constant 0 : i32
    %c0_i32_1 = arith.constant 0 : i32
    return %c0_i32, %c0_i32_0 : i32, i32
  }
  func.func @transform_6(%arg0: i32) -> (i32, i32) {
    %c0_i32 = arith.constant 0 : i32
    %c0_i32_0 = arith.constant 0 : i32
    %c0_i32_1 = arith.constant 0 : i32
    return %c0_i32, %c0_i32_0 : i32, i32
  }
  func.func @transform_7(%arg0: i32) -> (i32, i32) {
    %c0_i32 = arith.constant 0 : i32
    %c0_i32_0 = arith.constant 0 : i32
    return %arg0, %c0_i32 : i32, i32
  }
}

</mosaic_0001>

<llo_original>
// kernel: tpu_custom_call.1
$region0: #{tpu_custom_call.1}
  #allocation0 [shape = 'u32[]', space=smem, size = 0x4, offset = 0x4, fixed_abs, tag = 'smem constant byte address 0x4 - core index']
  #allocation1 [shape = 'u32[144,128]{1,0:T(1,128)}', space=vmem, size = 0x12000, scoped, tag = 'internal scratch']
  %s0 = inlined_call_operand.hbm [shape: f32[8,128], index: 0, kind: input, shape index: {}]
  %s1 = inlined_call_operand.hbm [shape: bf16[128,256], index: 1, kind: input, shape index: {}]
  %s2 = inlined_call_operand.vmem [shape: f32[1,256], index: 2, kind: input, shape index: {}]
  %s3 = inlined_call_operand.hbm [shape: bf16[256,512], index: 3, kind: input, shape index: {}]
  %s4 = inlined_call_operand.vmem [shape: f32[1,512], index: 4, kind: input, shape index: {}]
  %s5 = inlined_call_operand.hbm [shape: bf16[512,896], index: 5, kind: input, shape index: {}]
  %s6 = inlined_call_operand.vmem [shape: f32[1,896], index: 6, kind: input, shape index: {}]
  %s7 = inlined_call_operand.hbm [shape: f32[8,896], index: 7, kind: output, shape index: {}]
  %s8 = sld [smem:[#allocation0]]
  $region54: #{tpu_custom_call.1} parent=0
    _
  %s10 = ssub.s32 1, %s8
  %s11 = scalar_select 0, %s10, %s8
  $region1: #{tpu_custom_call.1} parent=0
    #allocation2 [shape = 'u8[4096]{0}', space=vmem, size = 0x1000, scoped, tag = 'input window, operand 0, single buffered']
    #allocation3 [shape = 's32[1]{0}', space=sflag, size = 0x4, scoped, tag = 'scoped memory for tpu_custom_call.1']
    #allocation4 [shape = 's32[1]{0}', space=sflag, size = 0x4, scoped, tag = 'scoped memory for tpu_custom_call.1']
    #allocation5 [shape = 'u8[65536]{0}', space=vmem, size = 0x10000, scoped, tag = 'input window, operand 1, single buffered']
    #allocation6 [shape = 's32[1]{0}', space=sflag, size = 0x4, scoped, tag = 'scoped memory for tpu_custom_call.1']
    #allocation7 [shape = 'u8[262144]{0}', space=vmem, size = 0x40000, scoped, tag = 'input window, operand 3, single buffered']
    #allocation8 [shape = 'u8[917504]{0}', space=vmem, size = 0xe0000, scoped, tag = 'input window, operand 5, single buffered']
    #allocation9 [shape = 's32[1]{0}', space=sflag, size = 0x4, scoped, tag = 'scoped memory for tpu_custom_call.1']
    #allocation10 [shape = 'u8[28672]{0}', space=vmem, size = 0x7000, scoped, tag = 'output window, operand 0, single buffered']
    %12 = vsyncpa [#allocation3], 0
    %13 = vsyncpa [#allocation6], 0
    %14 = vsyncpa [#allocation9], 0
    %15 = vsyncpa [#allocation4], 0
    // Predicated region
    $region2: #{tpu_custom_call.1} parent=1 // pred_check
      _
    $region3: #{tpu_custom_call.1} parent=1 // pred_check_branch
      %17 = sbr.rel (0) target = $region5
    $region4: #{tpu_custom_call.1} parent=1 // pred_region
      %s19 = ssub.s32 128, 128
      %20 = vsyncadd [#allocation3], %s19
      %s22 = sshll.u32 [#allocation2], 4
      %s23 = int_to_ptr.vmem [resolvable:$true] %s22
      %25 = dma.hbm_to_vmem [thread:$0]  %s0, 128, %s23, [#allocation3]
    $region5: #{tpu_custom_call.1} parent=1 // pred_fallthru
      _
    // Predicated region
    $region6: #{tpu_custom_call.1} parent=1 // pred_check
      _
    $region7: #{tpu_custom_call.1} parent=1 // pred_check_branch
      %27 = sbr.rel (0) target = $region9
    $region8: #{tpu_custom_call.1} parent=1 // pred_region
      %s29 = ssub.s32 2048, 2048
      %30 = vsyncadd [#allocation6], %s29
      %s31 = sshll.u32 [#allocation5], 4
      %s32 = int_to_ptr.vmem [resolvable:$true] %s31
      %37 = dma.hbm_to_vmem [thread:$0]  %s1, 2048, %s32, [#allocation6], 128, 128, 8
    $region9: #{tpu_custom_call.1} parent=1 // pred_fallthru
      _
    // Predicated region
    $region10: #{tpu_custom_call.1} parent=1 // pred_check
      _
    $region11: #{tpu_custom_call.1} parent=1 // pred_check_branch
      %39 = sbr.rel (0) target = $region13
    $region12: #{tpu_custom_call.1} parent=1 // pred_region
      _
    $region13: #{tpu_custom_call.1} parent=1 // pred_fallthru
      _
    // Predicated region
    $region14: #{tpu_custom_call.1} parent=1 // pred_check
      _
    $region15: #{tpu_custom_call.1} parent=1 // pred_check_branch
      %41 = sbr.rel (0) target = $region17
    $region16: #{tpu_custom_call.1} parent=1 // pred_region
      %s43 = ssub.s32 8192, 8192
      %44 = vsyncadd [#allocation6], %s43
      %s45 = sshll.u32 [#allocation7], 4
      %s46 = int_to_ptr.vmem [resolvable:$true] %s45
      %51 = dma.hbm_to_vmem [thread:$0]  %s3, 8192, %s46, [#allocation6], 256, 256, 16
    $region17: #{tpu_custom_call.1} parent=1 // pred_fallthru
      _
    // Predicated region
    $region18: #{tpu_custom_call.1} parent=1 // pred_check
      _
    $region19: #{tpu_custom_call.1} parent=1 // pred_check_branch
      %53 = sbr.rel (0) target = $region21
    $region20: #{tpu_custom_call.1} parent=1 // pred_region
      _
    $region21: #{tpu_custom_call.1} parent=1 // pred_fallthru
      _
    // Predicated region
    $region22: #{tpu_custom_call.1} parent=1 // pred_check
      _
    $region23: #{tpu_custom_call.1} parent=1 // pred_check_branch
      %55 = sbr.rel (0) target = $region25
    $region24: #{tpu_custom_call.1} parent=1 // pred_region
      %s57 = ssub.s32 28672, 28672
      %58 = vsyncadd [#allocation9], %s57
      %s59 = sshll.u32 [#allocation8], 4
      %s60 = int_to_ptr.vmem [resolvable:$true] %s59
      %65 = dma.hbm_to_vmem [thread:$0]  %s5, 28672, %s60, [#allocation9], 448, 448, 28
    $region25: #{tpu_custom_call.1} parent=1 // pred_fallthru
      _
    // Predicated region
    $region26: #{tpu_custom_call.1} parent=1 // pred_check
      _
    $region27: #{tpu_custom_call.1} parent=1 // pred_check_branch
      %67 = sbr.rel (0) target = $region29
    $region28: #{tpu_custom_call.1} parent=1 // pred_region
      _
    $region29: #{tpu_custom_call.1} parent=1 // pred_fallthru
      _
    // Predicated region
    $region30: #{tpu_custom_call.1} parent=1 // pred_check
      _
    $region31: #{tpu_custom_call.1} parent=1 // pred_check_branch
      %69 = sbr.rel (0) target = $region33
    $region32: #{tpu_custom_call.1} parent=1 // pred_region
      %70 = dma.done [#allocation3], 128
    $region33: #{tpu_custom_call.1} parent=1 // pred_fallthru
      _
    // Predicated region
    $region34: #{tpu_custom_call.1} parent=1 // pred_check
      _
    $region35: #{tpu_custom_call.1} parent=1 // pred_check_branch
      %72 = sbr.rel (0) target = $region37
    $region36: #{tpu_custom_call.1} parent=1 // pred_region
      %73 = dma.done [#allocation6], 2048
    $region37: #{tpu_custom_call.1} parent=1 // pred_fallthru
      _
    // Predicated region
    $region38: #{tpu_custom_call.1} parent=1 // pred_check
      _
    $region39: #{tpu_custom_call.1} parent=1 // pred_check_branch
      %75 = sbr.rel (0) target = $region41
    $region40: #{tpu_custom_call.1} parent=1 // pred_region
      %76 = dma.done [#allocation6], 8192
    $region41: #{tpu_custom_call.1} parent=1 // pred_fallthru
      _
    // Predicated region
    $region42: #{tpu_custom_call.1} parent=1 // pred_check
      _
    $region43: #{tpu_custom_call.1} parent=1 // pred_check_branch
      %78 = sbr.rel (0) target = $region45
    $region44: #{tpu_custom_call.1} parent=1 // pred_region
      %79 = dma.done [#allocation9], 28672
    $region45: #{tpu_custom_call.1} parent=1 // pred_fallthru
      _
    %v81 = vld [vmem:[#allocation2] sm:$0xff]
    %v82 = vpack.c.bf16 %v81, %v81
    %v83 = vld [vmem:[#allocation5] sm:$0xff]
    %v84 = vld [vmem:[#allocation5 + $0x8] sm:$0xff]
    %v85 = vld [vmem:[#allocation5 + $0x10] sm:$0xff]
    %v86 = vld [vmem:[#allocation5 + $0x18] sm:$0xff]
    %v87 = vld [vmem:[#allocation5 + $0x20] sm:$0xff]
    %v88 = vld [vmem:[#allocation5 + $0x28] sm:$0xff]
    %v89 = vld [vmem:[#allocation5 + $0x30] sm:$0xff]
    %v90 = vld [vmem:[#allocation5 + $0x38] sm:$0xff]
    %v91 = vld [vmem:[#allocation5 + $0x40] sm:$0xff]
    %v92 = vld [vmem:[#allocation5 + $0x48] sm:$0xff]
    %v93 = vld [vmem:[#allocation5 + $0x50] sm:$0xff]
    %v94 = vld [vmem:[#allocation5 + $0x58] sm:$0xff]
    %v95 = vld [vmem:[#allocation5 + $0x60] sm:$0xff]
    %v96 = vld [vmem:[#allocation5 + $0x68] sm:$0xff]
    %v97 = vld [vmem:[#allocation5 + $0x70] sm:$0xff]
    %v98 = vld [vmem:[#allocation5 + $0x78] sm:$0xff]
    %v99 = vld [vmem:[%s2] sm:$0x3]
    %v101 = vlaneseq
    %v102 = vshrl.u32 %v101, 7
    %v103 = vsub.s32 0, %v102
    %v104 = vrot.slane %v99, %v103
    %v105 = vlaneseq
    %v106 = vshrl.u32 %v105, 7
    %v107 = vsub.s32 1, %v106
    %v108 = vrot.slane %v99, %v107
    %v127 = vunpack.c.l.b16 %v83
    %v128 = vunpack.c.h.b16 %v83
    %v129 = vunpack.c.l.b16 %v84
    %v130 = vunpack.c.h.b16 %v84
    %v131 = vunpack.c.l.b16 %v85
    %v132 = vunpack.c.h.b16 %v85
    %v133 = vunpack.c.l.b16 %v86
    %v134 = vunpack.c.h.b16 %v86
    %v135 = vunpack.c.l.b16 %v87
    %v136 = vunpack.c.h.b16 %v87
    %v137 = vunpack.c.l.b16 %v88
    %v138 = vunpack.c.h.b16 %v88
    %v139 = vunpack.c.l.b16 %v89
    %v140 = vunpack.c.h.b16 %v89
    %v141 = vunpack.c.l.b16 %v90
    %v142 = vunpack.c.h.b16 %v90
    %v143 = vunpack.c.l.b16 %v91
    %v144 = vunpack.c.h.b16 %v91
    %v145 = vunpack.c.l.b16 %v92
    %v146 = vunpack.c.h.b16 %v92
    %v147 = vunpack.c.l.b16 %v93
    %v148 = vunpack.c.h.b16 %v93
    %v149 = vunpack.c.l.b16 %v94
    %v150 = vunpack.c.h.b16 %v94
    %v151 = vunpack.c.l.b16 %v95
    %v152 = vunpack.c.h.b16 %v95
    %v153 = vunpack.c.l.b16 %v96
    %v154 = vunpack.c.h.b16 %v96
    %v155 = vunpack.c.l.b16 %v97
    %v156 = vunpack.c.h.b16 %v97
    %v157 = vunpack.c.l.b16 %v98
    %v158 = vunpack.c.h.b16 %v98
    %v159 = vpack.c.b16 %v129, %v127
    %v160 = vpack.c.b16 %v130, %v128
    %v161 = vpack.c.b16 %v133, %v131
    %v162 = vpack.c.b16 %v134, %v132
    %v163 = vpack.c.b16 %v137, %v135
    %v164 = vpack.c.b16 %v138, %v136
    %v165 = vpack.c.b16 %v141, %v139
    %v166 = vpack.c.b16 %v142, %v140
    %v167 = vpack.c.b16 %v145, %v143
    %v168 = vpack.c.b16 %v146, %v144
    %v169 = vpack.c.b16 %v149, %v147
    %v170 = vpack.c.b16 %v150, %v148
    %v171 = vpack.c.b16 %v153, %v151
    %v172 = vpack.c.b16 %v154, %v152
    %v173 = vpack.c.b16 %v157, %v155
    %v174 = vpack.c.b16 %v158, %v156
    %191 = vmatprep.subr.bf16.mxu0 %v160
    %192 = vmatpush1.bf16.msra.mxu0 %v159
    %193 = vmatprep.subr.bf16.mxu0 %v162
    %194 = vmatpush1.bf16.msra.mxu0 %v161
    %195 = vmatprep.subr.bf16.mxu0 %v164
    %196 = vmatpush1.bf16.msra.mxu0 %v163
    %197 = vmatprep.subr.bf16.mxu0 %v166
    %198 = vmatpush1.bf16.msra.mxu0 %v165
    %199 = vmatprep.subr.bf16.mxu0 %v168
    %200 = vmatpush1.bf16.msra.mxu0 %v167
    %201 = vmatprep.subr.bf16.mxu0 %v170
    %202 = vmatpush1.bf16.msra.mxu0 %v169
    %203 = vmatprep.subr.bf16.mxu0 %v172
    %204 = vmatpush1.bf16.msra.mxu0 %v171
    %205 = vmatprep.subr.bf16.mxu0 %v174
    %206 = vmatpush1.bf16.msra.mxu0 %v173
    %207 = vmatprep.subr.bf16.mxu0 0
    %208 = vmatpush1.bf16.msra.mxu0 0
    %209 = vmatprep.subr.bf16.mxu0 0
    %210 = vmatpush1.bf16.msra.mxu0 0
    %211 = vmatprep.subr.bf16.mxu0 0
    %212 = vmatpush1.bf16.msra.mxu0 0
    %213 = vmatprep.subr.bf16.mxu0 0
    %214 = vmatpush1.bf16.msra.mxu0 0
    %215 = vmatprep.subr.bf16.mxu0 0
    %216 = vmatpush1.bf16.msra.mxu0 0
    %217 = vmatprep.subr.bf16.mxu0 0
    %218 = vmatpush1.bf16.msra.mxu0 0
    %219 = vmatprep.subr.bf16.mxu0 0
    %220 = vmatpush1.bf16.msra.mxu0 0
    %221 = vmatprep.subr.bf16.mxu0 0
    %222 = vmatpush1.bf16.msra.mxu0 0
    %223 = vmatprep.mubr.bf16.mxu0 0
    %224 = vmatmul.mubr.bf16.gmra.mrb[0].mxu0 %v82
    %v225 = vpop.f32.mrb[0].mxu0
    %v226 = vadd.f32 %v104, %v225
    %v227 = vpop.f32.mrb[0].mxu0
    %v228 = vadd.f32 %v108, %v227
    %v229 = vpop.f32.mrb[0].mxu0
    %v230 = vpop.f32.mrb[0].mxu0
    %231 = vdwg.mxu0
    %v232 = vmax.f32 %v226, 0.0
    %v233 = vmax.f32 %v228, 0.0
    %v234 = vpack.c.bf16 %v232, %v232
    %v235 = vpack.c.bf16 %v233, %v233
    %v236 = vld [vmem:[#allocation7] sm:$0xff]
    %v237 = vld [vmem:[#allocation7 + $0x8] sm:$0xff]
    %v238 = vld [vmem:[#allocation7 + $0x10] sm:$0xff]
    %v239 = vld [vmem:[#allocation7 + $0x18] sm:$0xff]
    %v240 = vld [vmem:[#allocation7 + $0x20] sm:$0xff]
    %v241 = vld [vmem:[#allocation7 + $0x28] sm:$0xff]
    %v242 = vld [vmem:[#allocation7 + $0x30] sm:$0xff]
    %v243 = vld [vmem:[#allocation7 + $0x38] sm:$0xff]
    %v244 = vld [vmem:[#allocation7 + $0x40] sm:$0xff]
    %v245 = vld [vmem:[#allocation7 + $0x48] sm:$0xff]
    %v246 = vld [vmem:[#allocation7 + $0x50] sm:$0xff]
    %v247 = vld [vmem:[#allocation7 + $0x58] sm:$0xff]
    %v248 = vld [vmem:[#allocation7 + $0x60] sm:$0xff]
    %v249 = vld [vmem:[#allocation7 + $0x68] sm:$0xff]
    %v250 = vld [vmem:[#allocation7 + $0x70] sm:$0xff]
    %v251 = vld [vmem:[#allocation7 + $0x78] sm:$0xff]
    %v252 = vld [vmem:[#allocation7 + $0x80] sm:$0xff]
    %v253 = vld [vmem:[#allocation7 + $0x88] sm:$0xff]
    %v254 = vld [vmem:[#allocation7 + $0x90] sm:$0xff]
    %v255 = vld [vmem:[#allocation7 + $0x98] sm:$0xff]
    %v256 = vld [vmem:[#allocation7 + $0xa0] sm:$0xff]
    %v257 = vld [vmem:[#allocation7 + $0xa8] sm:$0xff]
    %v258 = vld [vmem:[#allocation7 + $0xb0] sm:$0xff]
    %v259 = vld [vmem:[#allocation7 + $0xb8] sm:$0xff]
    %v260 = vld [vmem:[#allocation7 + $0xc0] sm:$0xff]
    %v261 = vld [vmem:[#allocation7 + $0xc8] sm:$0xff]
    %v262 = vld [vmem:[#allocation7 + $0xd0] sm:$0xff]
    %v263 = vld [vmem:[#allocation7 + $0xd8] sm:$0xff]
    %v264 = vld [vmem:[#allocation7 + $0xe0] sm:$0xff]
    %v265 = vld [vmem:[#allocation7 + $0xe8] sm:$0xff]
    %v266 = vld [vmem:[#allocation7 + $0xf0] sm:$0xff]
    %v267 = vld [vmem:[#allocation7 + $0xf8] sm:$0xff]
    %v268 = vld [vmem:[#allocation7 + $0x100] sm:$0xff]
    %v269 = vld [vmem:[#allocation7 + $0x108] sm:$0xff]
    %v270 = vld [vmem:[#allocation7 + $0x110] sm:$0xff]
    %v271 = vld [vmem:[#allocation7 + $0x118] sm:$0xff]
    %v272 = vld [vmem:[#allocation7 + $0x120] sm:$0xff]
    %v273 = vld [vmem:[#allocation7 + $0x128] sm:$0xff]
    %v274 = vld [vmem:[#allocation7 + $0x130] sm:$0xff]
    %v275 = vld [vmem:[#allocation7 + $0x138] sm:$0xff]
    %v276 = vld [vmem:[#allocation7 + $0x140] sm:$0xff]
    %v277 = vld [vmem:[#allocation7 + $0x148] sm:$0xff]
    %v278 = vld [vmem:[#allocation7 + $0x150] sm:$0xff]
    %v279 = vld [vmem:[#allocation7 + $0x158] sm:$0xff]
    %v280 = vld [vmem:[#allocation7 + $0x160] sm:$0xff]
    %v281 = vld [vmem:[#allocation7 + $0x168] sm:$0xff]
    %v282 = vld [vmem:[#allocation7 + $0x170] sm:$0xff]
    %v283 = vld [vmem:[#allocation7 + $0x178] sm:$0xff]
    %v284 = vld [vmem:[#allocation7 + $0x180] sm:$0xff]
    %v285 = vld [vmem:[#allocation7 + $0x188] sm:$0xff]
    %v286 = vld [vmem:[#allocation7 + $0x190] sm:$0xff]
    %v287 = vld [vmem:[#allocation7 + $0x198] sm:$0xff]
    %v288 = vld [vmem:[#allocation7 + $0x1a0] sm:$0xff]
    %v289 = vld [vmem:[#allocation7 + $0x1a8] sm:$0xff]
    %v290 = vld [vmem:[#allocation7 + $0x1b0] sm:$0xff]
    %v291 = vld [vmem:[#allocation7 + $0x1b8] sm:$0xff]
    %v292 = vld [vmem:[#allocation7 + $0x1c0] sm:$0xff]
    %v293 = vld [vmem:[#allocation7 + $0x1c8] sm:$0xff]
    %v294 = vld [vmem:[#allocation7 + $0x1d0] sm:$0xff]
    %v295 = vld [vmem:[#allocation7 + $0x1d8] sm:$0xff]
    %v296 = vld [vmem:[#allocation7 + $0x1e0] sm:$0xff]
    %v297 = vld [vmem:[#allocation7 + $0x1e8] sm:$0xff]
    %v298 = vld [vmem:[#allocation7 + $0x1f0] sm:$0xff]
    %v299 = vld [vmem:[#allocation7 + $0x1f8] sm:$0xff]
    %v300 = vld [vmem:[%s4] sm:$0xf]
    %v302 = vlaneseq
    %v303 = vshrl.u32 %v302, 7
    %v304 = vsub.s32 0, %v303
    %v305 = vrot.slane %v300, %v304
    %v306 = vlaneseq
    %v307 = vshrl.u32 %v306, 7
    %v308 = vsub.s32 1, %v307
    %v309 = vrot.slane %v300, %v308
    %v310 = vlaneseq
    %v311 = vshrl.u32 %v310, 7
    %v312 = vsub.s32 2, %v311
    %v313 = vrot.slane %v300, %v312
    %v314 = vlaneseq
    %v315 = vshrl.u32 %v314, 7
    %v316 = vsub.s32 3, %v315
    %v317 = vrot.slane %v300, %v316
    %v386 = vunpack.c.l.b16 %v236
    %v387 = vunpack.c.h.b16 %v236
    %v388 = vunpack.c.l.b16 %v237
    %v389 = vunpack.c.h.b16 %v237
    %v390 = vunpack.c.l.b16 %v238
    %v391 = vunpack.c.h.b16 %v238
    %v392 = vunpack.c.l.b16 %v239
    %v393 = vunpack.c.h.b16 %v239
    %v394 = vunpack.c.l.b16 %v240
    %v395 = vunpack.c.h.b16 %v240
    %v396 = vunpack.c.l.b16 %v241
    %v397 = vunpack.c.h.b16 %v241
    %v398 = vunpack.c.l.b16 %v242
    %v399 = vunpack.c.h.b16 %v242
    %v400 = vunpack.c.l.b16 %v243
    %v401 = vunpack.c.h.b16 %v243
    %v402 = vunpack.c.l.b16 %v244
    %v403 = vunpack.c.h.b16 %v244
    %v404 = vunpack.c.l.b16 %v245
    %v405 = vunpack.c.h.b16 %v245
    %v406 = vunpack.c.l.b16 %v246
    %v407 = vunpack.c.h.b16 %v246
    %v408 = vunpack.c.l.b16 %v247
    %v409 = vunpack.c.h.b16 %v247
    %v410 = vunpack.c.l.b16 %v248
    %v411 = vunpack.c.h.b16 %v248
    %v412 = vunpack.c.l.b16 %v249
    %v413 = vunpack.c.h.b16 %v249
    %v414 = vunpack.c.l.b16 %v250
    %v415 = vunpack.c.h.b16 %v250
    %v416 = vunpack.c.l.b16 %v251
    %v417 = vunpack.c.h.b16 %v251
    %v418 = vunpack.c.l.b16 %v252
    %v419 = vunpack.c.h.b16 %v252
    %v420 = vunpack.c.l.b16 %v253
    %v421 = vunpack.c.h.b16 %v253
    %v422 = vunpack.c.l.b16 %v254
    %v423 = vunpack.c.h.b16 %v254
    %v424 = vunpack.c.l.b16 %v255
    %v425 = vunpack.c.h.b16 %v255
    %v426 = vunpack.c.l.b16 %v256
    %v427 = vunpack.c.h.b16 %v256
    %v428 = vunpack.c.l.b16 %v257
    %v429 = vunpack.c.h.b16 %v257
    %v430 = vunpack.c.l.b16 %v258
    %v431 = vunpack.c.h.b16 %v258
    %v432 = vunpack.c.l.b16 %v259
    %v433 = vunpack.c.h.b16 %v259
    %v434 = vunpack.c.l.b16 %v260
    %v435 = vunpack.c.h.b16 %v260
    %v436 = vunpack.c.l.b16 %v261
    %v437 = vunpack.c.h.b16 %v261
    %v438 = vunpack.c.l.b16 %v262
    %v439 = vunpack.c.h.b16 %v262
    %v440 = vunpack.c.l.b16 %v263
    %v441 = vunpack.c.h.b16 %v263
    %v442 = vunpack.c.l.b16 %v264
    %v443 = vunpack.c.h.b16 %v264
    %v444 = vunpack.c.l.b16 %v265
    %v445 = vunpack.c.h.b16 %v265
    %v446 = vunpack.c.l.b16 %v266
    %v447 = vunpack.c.h.b16 %v266
    %v448 = vunpack.c.l.b16 %v267
    %v449 = vunpack.c.h.b16 %v267
    %v450 = vunpack.c.l.b16 %v268
    %v451 = vunpack.c.h.b16 %v268
    %v452 = vunpack.c.l.b16 %v269
    %v453 = vunpack.c.h.b16 %v269
    %v454 = vunpack.c.l.b16 %v270
    %v455 = vunpack.c.h.b16 %v270
    %v456 = vunpack.c.l.b16 %v271
    %v457 = vunpack.c.h.b16 %v271
    %v458 = vunpack.c.l.b16 %v272
    %v459 = vunpack.c.h.b16 %v272
    %v460 = vunpack.c.l.b16 %v273
    %v461 = vunpack.c.h.b16 %v273
    %v462 = vunpack.c.l.b16 %v274
    %v463 = vunpack.c.h.b16 %v274
    %v464 = vunpack.c.l.b16 %v275
    %v465 = vunpack.c.h.b16 %v275
    %v466 = vunpack.c.l.b16 %v276
    %v467 = vunpack.c.h.b16 %v276
    %v468 = vunpack.c.l.b16 %v277
    %v469 = vunpack.c.h.b16 %v277
    %v470 = vunpack.c.l.b16 %v278
    %v471 = vunpack.c.h.b16 %v278
    %v472 = vunpack.c.l.b16 %v279
    %v473 = vunpack.c.h.b16 %v279
    %v474 = vunpack.c.l.b16 %v280
    %v475 = vunpack.c.h.b16 %v280
    %v476 = vunpack.c.l.b16 %v281
    %v477 = vunpack.c.h.b16 %v281
    %v478 = vunpack.c.l.b16 %v282
    %v479 = vunpack.c.h.b16 %v282
    %v480 = vunpack.c.l.b16 %v283
    %v481 = vunpack.c.h.b16 %v283
    %v482 = vunpack.c.l.b16 %v284
    %v483 = vunpack.c.h.b16 %v284
    %v484 = vunpack.c.l.b16 %v285
    %v485 = vunpack.c.h.b16 %v285
    %v486 = vunpack.c.l.b16 %v286
    %v487 = vunpack.c.h.b16 %v286
    %v488 = vunpack.c.l.b16 %v287
    %v489 = vunpack.c.h.b16 %v287
    %v490 = vunpack.c.l.b16 %v288
    %v491 = vunpack.c.h.b16 %v288
    %v492 = vunpack.c.l.b16 %v289
    %v493 = vunpack.c.h.b16 %v289
    %v494 = vunpack.c.l.b16 %v290
    %v495 = vunpack.c.h.b16 %v290
    %v496 = vunpack.c.l.b16 %v291
    %v497 = vunpack.c.h.b16 %v291
    %v498 = vunpack.c.l.b16 %v292
    %v499 = vunpack.c.h.b16 %v292
    %v500 = vunpack.c.l.b16 %v293
    %v501 = vunpack.c.h.b16 %v293
    %v502 = vunpack.c.l.b16 %v294
    %v503 = vunpack.c.h.b16 %v294
    %v504 = vunpack.c.l.b16 %v295
    %v505 = vunpack.c.h.b16 %v295
    %v506 = vunpack.c.l.b16 %v296
    %v507 = vunpack.c.h.b16 %v296
    %v508 = vunpack.c.l.b16 %v297
    %v509 = vunpack.c.h.b16 %v297
    %v510 = vunpack.c.l.b16 %v298
    %v511 = vunpack.c.h.b16 %v298
    %v512 = vunpack.c.l.b16 %v299
    %v513 = vunpack.c.h.b16 %v299
    %v514 = vpack.c.b16 %v390, %v386
    %v515 = vpack.c.b16 %v391, %v387
    %v516 = vpack.c.b16 %v392, %v388
    %v517 = vpack.c.b16 %v393, %v389
    %v518 = vpack.c.b16 %v398, %v394
    %v519 = vpack.c.b16 %v399, %v395
    %v520 = vpack.c.b16 %v400, %v396
    %v521 = vpack.c.b16 %v401, %v397
    %v522 = vpack.c.b16 %v406, %v402
    %v523 = vpack.c.b16 %v407, %v403
    %v524 = vpack.c.b16 %v408, %v404
    %v525 = vpack.c.b16 %v409, %v405
    %v526 = vpack.c.b16 %v414, %v410
    %v527 = vpack.c.b16 %v415, %v411
    %v528 = vpack.c.b16 %v416, %v412
    %v529 = vpack.c.b16 %v417, %v413
    %v530 = vpack.c.b16 %v422, %v418
    %v531 = vpack.c.b16 %v423, %v419
    %v532 = vpack.c.b16 %v424, %v420
    %v533 = vpack.c.b16 %v425, %v421
    %v534 = vpack.c.b16 %v430, %v426
    %v535 = vpack.c.b16 %v431, %v427
    %v536 = vpack.c.b16 %v432, %v428
    %v537 = vpack.c.b16 %v433, %v429
    %v538 = vpack.c.b16 %v438, %v434
    %v539 = vpack.c.b16 %v439, %v435
    %v540 = vpack.c.b16 %v440, %v436
    %v541 = vpack.c.b16 %v441, %v437
    %v542 = vpack.c.b16 %v446, %v442
    %v543 = vpack.c.b16 %v447, %v443
    %v544 = vpack.c.b16 %v448, %v444
    %v545 = vpack.c.b16 %v449, %v445
    %v546 = vpack.c.b16 %v454, %v450
    %v547 = vpack.c.b16 %v455, %v451
    %v548 = vpack.c.b16 %v456, %v452
    %v549 = vpack.c.b16 %v457, %v453
    %v550 = vpack.c.b16 %v462, %v458
    %v551 = vpack.c.b16 %v463, %v459
    %v552 = vpack.c.b16 %v464, %v460
    %v553 = vpack.c.b16 %v465, %v461
    %v554 = vpack.c.b16 %v470, %v466
    %v555 = vpack.c.b16 %v471, %v467
    %v556 = vpack.c.b16 %v472, %v468
    %v557 = vpack.c.b16 %v473, %v469
    %v558 = vpack.c.b16 %v478, %v474
    %v559 = vpack.c.b16 %v479, %v475
    %v560 = vpack.c.b16 %v480, %v476
    %v561 = vpack.c.b16 %v481, %v477
    %v562 = vpack.c.b16 %v486, %v482
    %v563 = vpack.c.b16 %v487, %v483
    %v564 = vpack.c.b16 %v488, %v484
    %v565 = vpack.c.b16 %v489, %v485
    %v566 = vpack.c.b16 %v494, %v490
    %v567 = vpack.c.b16 %v495, %v491
    %v568 = vpack.c.b16 %v496, %v492
    %v569 = vpack.c.b16 %v497, %v493
    %v570 = vpack.c.b16 %v502, %v498
    %v571 = vpack.c.b16 %v503, %v499
    %v572 = vpack.c.b16 %v504, %v500
    %v573 = vpack.c.b16 %v505, %v501
    %v574 = vpack.c.b16 %v510, %v506
    %v575 = vpack.c.b16 %v511, %v507
    %v576 = vpack.c.b16 %v512, %v508
    %v577 = vpack.c.b16 %v513, %v509
    %642 = vmatprep.subr.bf16.mxu0 %v515
    %643 = vmatpush1.bf16.msra.mxu0 %v514
    %644 = vmatprep.subr.bf16.mxu0 %v519
    %645 = vmatpush1.bf16.msra.mxu0 %v518
    %646 = vmatprep.subr.bf16.mxu0 %v523
    %647 = vmatpush1.bf16.msra.mxu0 %v522
    %648 = vmatprep.subr.bf16.mxu0 %v527
    %649 = vmatpush1.bf16.msra.mxu0 %v526
    %650 = vmatprep.subr.bf16.mxu0 %v531
    %651 = vmatpush1.bf16.msra.mxu0 %v530
    %652 = vmatprep.subr.bf16.mxu0 %v535
    %653 = vmatpush1.bf16.msra.mxu0 %v534
    %654 = vmatprep.subr.bf16.mxu0 %v539
    %655 = vmatpush1.bf16.msra.mxu0 %v538
    %656 = vmatprep.subr.bf16.mxu0 %v543
    %657 = vmatpush1.bf16.msra.mxu0 %v542
    %658 = vmatprep.subr.bf16.mxu0 %v547
    %659 = vmatpush1.bf16.msra.mxu0 %v546
    %660 = vmatprep.subr.bf16.mxu0 %v551
    %661 = vmatpush1.bf16.msra.mxu0 %v550
    %662 = vmatprep.subr.bf16.mxu0 %v555
    %663 = vmatpush1.bf16.msra.mxu0 %v554
    %664 = vmatprep.subr.bf16.mxu0 %v559
    %665 = vmatpush1.bf16.msra.mxu0 %v558
    %666 = vmatprep.subr.bf16.mxu0 %v563
    %667 = vmatpush1.bf16.msra.mxu0 %v562
    %668 = vmatprep.subr.bf16.mxu0 %v567
    %669 = vmatpush1.bf16.msra.mxu0 %v566
    %670 = vmatprep.subr.bf16.mxu0 %v571
    %671 = vmatpush1.bf16.msra.mxu0 %v570
    %672 = vmatprep.subr.bf16.mxu0 %v575
    %673 = vmatpush1.bf16.msra.mxu0 %v574
    %674 = vmatprep.mubr.bf16.mxu0 %v235
    %675 = vmatmul.mubr.bf16.gmra.mrb[0].mxu0 %v234
    %v676 = vpop.f32.mrb[0].mxu0
    %v677 = vadd.f32 %v305, %v676
    %v678 = vpop.f32.mrb[0].mxu0
    %v679 = vadd.f32 %v309, %v678
    %v680 = vpop.f32.mrb[0].mxu0
    %v681 = vpop.f32.mrb[0].mxu0
    %682 = vdwg.mxu0
    %683 = vmatprep.subr.bf16.mxu0 %v517
    %684 = vmatpush1.bf16.msra.mxu0 %v516
    %685 = vmatprep.subr.bf16.mxu0 %v521
    %686 = vmatpush1.bf16.msra.mxu0 %v520
    %687 = vmatprep.subr.bf16.mxu0 %v525
    %688 = vmatpush1.bf16.msra.mxu0 %v524
    %689 = vmatprep.subr.bf16.mxu0 %v529
    %690 = vmatpush1.bf16.msra.mxu0 %v528
    %691 = vmatprep.subr.bf16.mxu0 %v533
    %692 = vmatpush1.bf16.msra.mxu0 %v532
    %693 = vmatprep.subr.bf16.mxu0 %v537
    %694 = vmatpush1.bf16.msra.mxu0 %v536
    %695 = vmatprep.subr.bf16.mxu0 %v541
    %696 = vmatpush1.bf16.msra.mxu0 %v540
    %697 = vmatprep.subr.bf16.mxu0 %v545
    %698 = vmatpush1.bf16.msra.mxu0 %v544
    %699 = vmatprep.subr.bf16.mxu0 %v549
    %700 = vmatpush1.bf16.msra.mxu0 %v548
    %701 = vmatprep.subr.bf16.mxu0 %v553
    %702 = vmatpush1.bf16.msra.mxu0 %v552
    %703 = vmatprep.subr.bf16.mxu0 %v557
    %704 = vmatpush1.bf16.msra.mxu0 %v556
    %705 = vmatprep.subr.bf16.mxu0 %v561
    %706 = vmatpush1.bf16.msra.mxu0 %v560
    %707 = vmatprep.subr.bf16.mxu0 %v565
    %708 = vmatpush1.bf16.msra.mxu0 %v564
    %709 = vmatprep.subr.bf16.mxu0 %v569
    %710 = vmatpush1.bf16.msra.mxu0 %v568
    %711 = vmatprep.subr.bf16.mxu0 %v573
    %712 = vmatpush1.bf16.msra.mxu0 %v572
    %713 = vmatprep.subr.bf16.mxu0 %v577
    %714 = vmatpush1.bf16.msra.mxu0 %v576
    %715 = vmatprep.mubr.bf16.mxu0 %v235
    %716 = vmatmul.mubr.bf16.gmra.mrb[0].mxu0 %v234
    %v717 = vpop.f32.mrb[0].mxu0
    %v718 = vadd.f32 %v313, %v717
    %v719 = vpop.f32.mrb[0].mxu0
    %v720 = vadd.f32 %v317, %v719
    %v721 = vpop.f32.mrb[0].mxu0
    %v722 = vpop.f32.mrb[0].mxu0
    %723 = vdwg.mxu0
    %v724 = vmax.f32 %v677, 0.0
    %v725 = vmax.f32 %v679, 0.0
    %v726 = vmax.f32 %v718, 0.0
    %v727 = vmax.f32 %v720, 0.0
    %v728 = vpack.c.bf16 %v724, %v724
    %v729 = vpack.c.bf16 %v725, %v725
    %v730 = vpack.c.bf16 %v726, %v726
    %v731 = vpack.c.bf16 %v727, %v727
    %v732 = vld [vmem:[#allocation8] sm:$0xff]
    %v733 = vld [vmem:[#allocation8 + $0x8] sm:$0xff]
    %v734 = vld [vmem:[#allocation8 + $0x10] sm:$0xff]
    %v735 = vld [vmem:[#allocation8 + $0x18] sm:$0xf]
    %v736 = vld [vmem:[#allocation8 + $0x1c] sm:$0xff]
    %v737 = vld [vmem:[#allocation8 + $0x24] sm:$0xff]
    %v738 = vld [vmem:[#allocation8 + $0x2c] sm:$0xff]
    %v739 = vld [vmem:[#allocation8 + $0x34] sm:$0xf]
    %v740 = vld [vmem:[#allocation8 + $0x38] sm:$0xff]
    %v741 = vld [vmem:[#allocation8 + $0x40] sm:$0xff]
    %v742 = vld [vmem:[#allocation8 + $0x48] sm:$0xff]
    %v743 = vld [vmem:[#allocation8 + $0x50] sm:$0xf]
    %v744 = vld [vmem:[#allocation8 + $0x54] sm:$0xff]
    %v745 = vld [vmem:[#allocation8 + $0x5c] sm:$0xff]
    %v746 = vld [vmem:[#allocation8 + $0x64] sm:$0xff]
    %v747 = vld [vmem:[#allocation8 + $0x6c] sm:$0xf]
    %v748 = vld [vmem:[#allocation8 + $0x70] sm:$0xff]
    %v749 = vld [vmem:[#allocation8 + $0x78] sm:$0xff]
    %v750 = vld [vmem:[#allocation8 + $0x80] sm:$0xff]
    %v751 = vld [vmem:[#allocation8 + $0x88] sm:$0xf]
    %v752 = vld [vmem:[#allocation8 + $0x8c] sm:$0xff]
    %v753 = vld [vmem:[#allocation8 + $0x94] sm:$0xff]
    %v754 = vld [vmem:[#allocation8 + $0x9c] sm:$0xff]
    %v755 = vld [vmem:[#allocation8 + $0xa4] sm:$0xf]
    %v756 = vld [vmem:[#allocation8 + $0xa8] sm:$0xff]
    %v757 = vld [vmem:[#allocation8 + $0xb0] sm:$0xff]
    %v758 = vld [vmem:[#allocation8 + $0xb8] sm:$0xff]
    %v759 = vld [vmem:[#allocation8 + $0xc0] sm:$0xf]
    %v760 = vld [vmem:[#allocation8 + $0xc4] sm:$0xff]
    %v761 = vld [vmem:[#allocation8 + $0xcc] sm:$0xff]
    %v762 = vld [vmem:[#allocation8 + $0xd4] sm:$0xff]
    %v763 = vld [vmem:[#allocation8 + $0xdc] sm:$0xf]
    %v764 = vld [vmem:[#allocation8 + $0xe0] sm:$0xff]
    %v765 = vld [vmem:[#allocation8 + $0xe8] sm:$0xff]
    %v766 = vld [vmem:[#allocation8 + $0xf0] sm:$0xff]
    %v767 = vld [vmem:[#allocation8 + $0xf8] sm:$0xf]
    %v768 = vld [vmem:[#allocation8 + $0xfc] sm:$0xff]
    %v769 = vld [vmem:[#allocation8 + $0x104] sm:$0xff]
    %v770 = vld [vmem:[#allocation8 + $0x10c] sm:$0xff]
    %v771 = vld [vmem:[#allocation8 + $0x114] sm:$0xf]
    %v772 = vld [vmem:[#allocation8 + $0x118] sm:$0xff]
    %v773 = vld [vmem:[#allocation8 + $0x120] sm:$0xff]
    %v774 = vld [vmem:[#allocation8 + $0x128] sm:$0xff]
    %v775 = vld [vmem:[#allocation8 + $0x130] sm:$0xf]
    %v776 = vld [vmem:[#allocation8 + $0x134] sm:$0xff]
    %v777 = vld [vmem:[#allocation8 + $0x13c] sm:$0xff]
    %v778 = vld [vmem:[#allocation8 + $0x144] sm:$0xff]
    %v779 = vld [vmem:[#allocation8 + $0x14c] sm:$0xf]
    %v780 = vld [vmem:[#allocation8 + $0x150] sm:$0xff]
    %v781 = vld [vmem:[#allocation8 + $0x158] sm:$0xff]
    %v782 = vld [vmem:[#allocation8 + $0x160] sm:$0xff]
    %v783 = vld [vmem:[#allocation8 + $0x168] sm:$0xf]
    %v784 = vld [vmem:[#allocation8 + $0x16c] sm:$0xff]
    %v785 = vld [vmem:[#allocation8 + $0x174] sm:$0xff]
    %v786 = vld [vmem:[#allocation8 + $0x17c] sm:$0xff]
    %v787 = vld [vmem:[#allocation8 + $0x184] sm:$0xf]
    %v788 = vld [vmem:[#allocation8 + $0x188] sm:$0xff]
    %v789 = vld [vmem:[#allocation8 + $0x190] sm:$0xff]
    %v790 = vld [vmem:[#allocation8 + $0x198] sm:$0xff]
    %v791 = vld [vmem:[#allocation8 + $0x1a0] sm:$0xf]
    %v792 = vld [vmem:[#allocation8 + $0x1a4] sm:$0xff]
    %v793 = vld [vmem:[#allocation8 + $0x1ac] sm:$0xff]
    %v794 = vld [vmem:[#allocation8 + $0x1b4] sm:$0xff]
    %v795 = vld [vmem:[#allocation8 + $0x1bc] sm:$0xf]
    %v796 = vld [vmem:[#allocation8 + $0x1c0] sm:$0xff]
    %v797 = vld [vmem:[#allocation8 + $0x1c8] sm:$0xff]
    %v798 = vld [vmem:[#allocation8 + $0x1d0] sm:$0xff]
    %v799 = vld [vmem:[#allocation8 + $0x1d8] sm:$0xf]
    %v800 = vld [vmem:[#allocation8 + $0x1dc] sm:$0xff]
    %v801 = vld [vmem:[#allocation8 + $0x1e4] sm:$0xff]
    %v802 = vld [vmem:[#allocation8 + $0x1ec] sm:$0xff]
    %v803 = vld [vmem:[#allocation8 + $0x1f4] sm:$0xf]
    %v804 = vld [vmem:[#allocation8 + $0x1f8] sm:$0xff]
    %v805 = vld [vmem:[#allocation8 + $0x200] sm:$0xff]
    %v806 = vld [vmem:[#allocation8 + $0x208] sm:$0xff]
    %v807 = vld [vmem:[#allocation8 + $0x210] sm:$0xf]
    %v808 = vld [vmem:[#allocation8 + $0x214] sm:$0xff]
    %v809 = vld [vmem:[#allocation8 + $0x21c] sm:$0xff]
    %v810 = vld [vmem:[#allocation8 + $0x224] sm:$0xff]
    %v811 = vld [vmem:[#allocation8 + $0x22c] sm:$0xf]
    %v812 = vld [vmem:[#allocation8 + $0x230] sm:$0xff]
    %v813 = vld [vmem:[#allocation8 + $0x238] sm:$0xff]
    %v814 = vld [vmem:[#allocation8 + $0x240] sm:$0xff]
    %v815 = vld [vmem:[#allocation8 + $0x248] sm:$0xf]
    %v816 = vld [vmem:[#allocation8 + $0x24c] sm:$0xff]
    %v817 = vld [vmem:[#allocation8 + $0x254] sm:$0xff]
    %v818 = vld [vmem:[#allocation8 + $0x25c] sm:$0xff]
    %v819 = vld [vmem:[#allocation8 + $0x264] sm:$0xf]
    %v820 = vld [vmem:[#allocation8 + $0x268] sm:$0xff]
    %v821 = vld [vmem:[#allocation8 + $0x270] sm:$0xff]
    %v822 = vld [vmem:[#allocation8 + $0x278] sm:$0xff]
    %v823 = vld [vmem:[#allocation8 + $0x280] sm:$0xf]
    %v824 = vld [vmem:[#allocation8 + $0x284] sm:$0xff]
    %v825 = vld [vmem:[#allocation8 + $0x28c] sm:$0xff]
    %v826 = vld [vmem:[#allocation8 + $0x294] sm:$0xff]
    %v827 = vld [vmem:[#allocation8 + $0x29c] sm:$0xf]
    %v828 = vld [vmem:[#allocation8 + $0x2a0] sm:$0xff]
    %v829 = vld [vmem:[#allocation8 + $0x2a8] sm:$0xff]
    %v830 = vld [vmem:[#allocation8 + $0x2b0] sm:$0xff]
    %v831 = vld [vmem:[#allocation8 + $0x2b8] sm:$0xf]
    %v832 = vld [vmem:[#allocation8 + $0x2bc] sm:$0xff]
    %v833 = vld [vmem:[#allocation8 + $0x2c4] sm:$0xff]
    %v834 = vld [vmem:[#allocation8 + $0x2cc] sm:$0xff]
    %v835 = vld [vmem:[#allocation8 + $0x2d4] sm:$0xf]
    %v836 = vld [vmem:[#allocation8 + $0x2d8] sm:$0xff]
    %v837 = vld [vmem:[#allocation8 + $0x2e0] sm:$0xff]
    %v838 = vld [vmem:[#allocation8 + $0x2e8] sm:$0xff]
    %v839 = vld [vmem:[#allocation8 + $0x2f0] sm:$0xf]
    %v840 = vld [vmem:[#allocation8 + $0x2f4] sm:$0xff]
    %v841 = vld [vmem:[#allocation8 + $0x2fc] sm:$0xff]
    %v842 = vld [vmem:[#allocation8 + $0x304] sm:$0xff]
    %v843 = vld [vmem:[#allocation8 + $0x30c] sm:$0xf]
    %v844 = vld [vmem:[#allocation8 + $0x310] sm:$0xff]
    %v845 = vld [vmem:[#allocation8 + $0x318] sm:$0xff]
    %v846 = vld [vmem:[#allocation8 + $0x320] sm:$0xff]
    %v847 = vld [vmem:[#allocation8 + $0x328] sm:$0xf]
    %v848 = vld [vmem:[#allocation8 + $0x32c] sm:$0xff]
    %v849 = vld [vmem:[#allocation8 + $0x334] sm:$0xff]
    %v850 = vld [vmem:[#allocation8 + $0x33c] sm:$0xff]
    %v851 = vld [vmem:[#allocation8 + $0x344] sm:$0xf]
    %v852 = vld [vmem:[#allocation8 + $0x348] sm:$0xff]
    %v853 = vld [vmem:[#allocation8 + $0x350] sm:$0xff]
    %v854 = vld [vmem:[#allocation8 + $0x358] sm:$0xff]
    %v855 = vld [vmem:[#allocation8 + $0x360] sm:$0xf]
    %v856 = vld [vmem:[#allocation8 + $0x364] sm:$0xff]
    %v857 = vld [vmem:[#allocation8 + $0x36c] sm:$0xff]
    %v858 = vld [vmem:[#allocation8 + $0x374] sm:$0xff]
    %v859 = vld [vmem:[#allocation8 + $0x37c] sm:$0xf]
    %v860 = vld [vmem:[#allocation8 + $0x380] sm:$0xff]
    %v861 = vld [vmem:[#allocation8 + $0x388] sm:$0xff]
    %v862 = vld [vmem:[#allocation8 + $0x390] sm:$0xff]
    %v863 = vld [vmem:[#allocation8 + $0x398] sm:$0xf]
    %v864 = vld [vmem:[#allocation8 + $0x39c] sm:$0xff]
    %v865 = vld [vmem:[#allocation8 + $0x3a4] sm:$0xff]
    %v866 = vld [vmem:[#allocation8 + $0x3ac] sm:$0xff]
    %v867 = vld [vmem:[#allocation8 + $0x3b4] sm:$0xf]
    %v868 = vld [vmem:[#allocation8 + $0x3b8] sm:$0xff]
    %v869 = vld [vmem:[#allocation8 + $0x3c0] sm:$0xff]
    %v870 = vld [vmem:[#allocation8 + $0x3c8] sm:$0xff]
    %v871 = vld [vmem:[#allocation8 + $0x3d0] sm:$0xf]
    %v872 = vld [vmem:[#allocation8 + $0x3d4] sm:$0xff]
    %v873 = vld [vmem:[#allocation8 + $0x3dc] sm:$0xff]
    %v874 = vld [vmem:[#allocation8 + $0x3e4] sm:$0xff]
    %v875 = vld [vmem:[#allocation8 + $0x3ec] sm:$0xf]
    %v876 = vld [vmem:[#allocation8 + $0x3f0] sm:$0xff]
    %v877 = vld [vmem:[#allocation8 + $0x3f8] sm:$0xff]
    %v878 = vld [vmem:[#allocation8 + $0x400] sm:$0xff]
    %v879 = vld [vmem:[#allocation8 + $0x408] sm:$0xf]
    %v880 = vld [vmem:[#allocation8 + $0x40c] sm:$0xff]
    %v881 = vld [vmem:[#allocation8 + $0x414] sm:$0xff]
    %v882 = vld [vmem:[#allocation8 + $0x41c] sm:$0xff]
    %v883 = vld [vmem:[#allocation8 + $0x424] sm:$0xf]
    %v884 = vld [vmem:[#allocation8 + $0x428] sm:$0xff]
    %v885 = vld [vmem:[#allocation8 + $0x430] sm:$0xff]
    %v886 = vld [vmem:[#allocation8 + $0x438] sm:$0xff]
    %v887 = vld [vmem:[#allocation8 + $0x440] sm:$0xf]
    %v888 = vld [vmem:[#allocation8 + $0x444] sm:$0xff]
    %v889 = vld [vmem:[#allocation8 + $0x44c] sm:$0xff]
    %v890 = vld [vmem:[#allocation8 + $0x454] sm:$0xff]
    %v891 = vld [vmem:[#allocation8 + $0x45c] sm:$0xf]
    %v892 = vld [vmem:[#allocation8 + $0x460] sm:$0xff]
    %v893 = vld [vmem:[#allocation8 + $0x468] sm:$0xff]
    %v894 = vld [vmem:[#allocation8 + $0x470] sm:$0xff]
    %v895 = vld [vmem:[#allocation8 + $0x478] sm:$0xf]
    %v896 = vld [vmem:[#allocation8 + $0x47c] sm:$0xff]
    %v897 = vld [vmem:[#allocation8 + $0x484] sm:$0xff]
    %v898 = vld [vmem:[#allocation8 + $0x48c] sm:$0xff]
    %v899 = vld [vmem:[#allocation8 + $0x494] sm:$0xf]
    %v900 = vld [vmem:[#allocation8 + $0x498] sm:$0xff]
    %v901 = vld [vmem:[#allocation8 + $0x4a0] sm:$0xff]
    %v902 = vld [vmem:[#allocation8 + $0x4a8] sm:$0xff]
    %v903 = vld [vmem:[#allocation8 + $0x4b0] sm:$0xf]
    %v904 = vld [vmem:[#allocation8 + $0x4b4] sm:$0xff]
    %v905 = vld [vmem:[#allocation8 + $0x4bc] sm:$0xff]
    %v906 = vld [vmem:[#allocation8 + $0x4c4] sm:$0xff]
    %v907 = vld [vmem:[#allocation8 + $0x4cc] sm:$0xf]
    %v908 = vld [vmem:[#allocation8 + $0x4d0] sm:$0xff]
    %v909 = vld [vmem:[#allocation8 + $0x4d8] sm:$0xff]
    %v910 = vld [vmem:[#allocation8 + $0x4e0] sm:$0xff]
    %v911 = vld [vmem:[#allocation8 + $0x4e8] sm:$0xf]
    %v912 = vld [vmem:[#allocation8 + $0x4ec] sm:$0xff]
    %v913 = vld [vmem:[#allocation8 + $0x4f4] sm:$0xff]
    %v914 = vld [vmem:[#allocation8 + $0x4fc] sm:$0xff]
    %v915 = vld [vmem:[#allocation8 + $0x504] sm:$0xf]
    %v916 = vld [vmem:[#allocation8 + $0x508] sm:$0xff]
    %v917 = vld [vmem:[#allocation8 + $0x510] sm:$0xff]
    %v918 = vld [vmem:[#allocation8 + $0x518] sm:$0xff]
    %v919 = vld [vmem:[#allocation8 + $0x520] sm:$0xf]
    %v920 = vld [vmem:[#allocation8 + $0x524] sm:$0xff]
    %v921 = vld [vmem:[#allocation8 + $0x52c] sm:$0xff]
    %v922 = vld [vmem:[#allocation8 + $0x534] sm:$0xff]
    %v923 = vld [vmem:[#allocation8 + $0x53c] sm:$0xf]
    %v924 = vld [vmem:[#allocation8 + $0x540] sm:$0xff]
    %v925 = vld [vmem:[#allocation8 + $0x548] sm:$0xff]
    %v926 = vld [vmem:[#allocation8 + $0x550] sm:$0xff]
    %v927 = vld [vmem:[#allocation8 + $0x558] sm:$0xf]
    %v928 = vld [vmem:[#allocation8 + $0x55c] sm:$0xff]
    %v929 = vld [vmem:[#allocation8 + $0x564] sm:$0xff]
    %v930 = vld [vmem:[#allocation8 + $0x56c] sm:$0xff]
    %v931 = vld [vmem:[#allocation8 + $0x574] sm:$0xf]
    %v932 = vld [vmem:[#allocation8 + $0x578] sm:$0xff]
    %v933 = vld [vmem:[#allocation8 + $0x580] sm:$0xff]
    %v934 = vld [vmem:[#allocation8 + $0x588] sm:$0xff]
    %v935 = vld [vmem:[#allocation8 + $0x590] sm:$0xf]
    %v936 = vld [vmem:[#allocation8 + $0x594] sm:$0xff]
    %v937 = vld [vmem:[#allocation8 + $0x59c] sm:$0xff]
    %v938 = vld [vmem:[#allocation8 + $0x5a4] sm:$0xff]
    %v939 = vld [vmem:[#allocation8 + $0x5ac] sm:$0xf]
    %v940 = vld [vmem:[#allocation8 + $0x5b0] sm:$0xff]
    %v941 = vld [vmem:[#allocation8 + $0x5b8] sm:$0xff]
    %v942 = vld [vmem:[#allocation8 + $0x5c0] sm:$0xff]
    %v943 = vld [vmem:[#allocation8 + $0x5c8] sm:$0xf]
    %v944 = vld [vmem:[#allocation8 + $0x5cc] sm:$0xff]
    %v945 = vld [vmem:[#allocation8 + $0x5d4] sm:$0xff]
    %v946 = vld [vmem:[#allocation8 + $0x5dc] sm:$0xff]
    %v947 = vld [vmem:[#allocation8 + $0x5e4] sm:$0xf]
    %v948 = vld [vmem:[#allocation8 + $0x5e8] sm:$0xff]
    %v949 = vld [vmem:[#allocation8 + $0x5f0] sm:$0xff]
    %v950 = vld [vmem:[#allocation8 + $0x5f8] sm:$0xff]
    %v951 = vld [vmem:[#allocation8 + $0x600] sm:$0xf]
    %v952 = vld [vmem:[#allocation8 + $0x604] sm:$0xff]
    %v953 = vld [vmem:[#allocation8 + $0x60c] sm:$0xff]
    %v954 = vld [vmem:[#allocation8 + $0x614] sm:$0xff]
    %v955 = vld [vmem:[#allocation8 + $0x61c] sm:$0xf]
    %v956 = vld [vmem:[#allocation8 + $0x620] sm:$0xff]
    %v957 = vld [vmem:[#allocation8 + $0x628] sm:$0xff]
    %v958 = vld [vmem:[#allocation8 + $0x630] sm:$0xff]
    %v959 = vld [vmem:[#allocation8 + $0x638] sm:$0xf]
    %v960 = vld [vmem:[#allocation8 + $0x63c] sm:$0xff]
    %v961 = vld [vmem:[#allocation8 + $0x644] sm:$0xff]
    %v962 = vld [vmem:[#allocation8 + $0x64c] sm:$0xff]
    %v963 = vld [vmem:[#allocation8 + $0x654] sm:$0xf]
    %v964 = vld [vmem:[#allocation8 + $0x658] sm:$0xff]
    %v965 = vld [vmem:[#allocation8 + $0x660] sm:$0xff]
    %v966 = vld [vmem:[#allocation8 + $0x668] sm:$0xff]
    %v967 = vld [vmem:[#allocation8 + $0x670] sm:$0xf]
    %v968 = vld [vmem:[#allocation8 + $0x674] sm:$0xff]
    %v969 = vld [vmem:[#allocation8 + $0x67c] sm:$0xff]
    %v970 = vld [vmem:[#allocation8 + $0x684] sm:$0xff]
    %v971 = vld [vmem:[#allocation8 + $0x68c] sm:$0xf]
    %v972 = vld [vmem:[#allocation8 + $0x690] sm:$0xff]
    %v973 = vld [vmem:[#allocation8 + $0x698] sm:$0xff]
    %v974 = vld [vmem:[#allocation8 + $0x6a0] sm:$0xff]
    %v975 = vld [vmem:[#allocation8 + $0x6a8] sm:$0xf]
    %v976 = vld [vmem:[#allocation8 + $0x6ac] sm:$0xff]
    %v977 = vld [vmem:[#allocation8 + $0x6b4] sm:$0xff]
    %v978 = vld [vmem:[#allocation8 + $0x6bc] sm:$0xff]
    %v979 = vld [vmem:[#allocation8 + $0x6c4] sm:$0xf]
    %v980 = vld [vmem:[#allocation8 + $0x6c8] sm:$0xff]
    %v981 = vld [vmem:[#allocation8 + $0x6d0] sm:$0xff]
    %v982 = vld [vmem:[#allocation8 + $0x6d8] sm:$0xff]
    %v983 = vld [vmem:[#allocation8 + $0x6e0] sm:$0xf]
    %v984 = vld [vmem:[#allocation8 + $0x6e4] sm:$0xff]
    %v985 = vld [vmem:[#allocation8 + $0x6ec] sm:$0xff]
    %v986 = vld [vmem:[#allocation8 + $0x6f4] sm:$0xff]
    %v987 = vld [vmem:[#allocation8 + $0x6fc] sm:$0xf]
    %v988 = vld [vmem:[%s6] sm:$0xff]
    %v990 = vlaneseq
    %v991 = vshrl.u32 %v990, 7
    %v992 = vsub.s32 0, %v991
    %v993 = vrot.slane %v988, %v992
    %v994 = vlaneseq
    %v995 = vshrl.u32 %v994, 7
    %v996 = vsub.s32 1, %v995
    %v997 = vrot.slane %v988, %v996
    %v998 = vlaneseq
    %v999 = vshrl.u32 %v998, 7
    %v1000 = vsub.s32 2, %v999
    %v1001 = vrot.slane %v988, %v1000
    %v1002 = vlaneseq
    %v1003 = vshrl.u32 %v1002, 7
    %v1004 = vsub.s32 3, %v1003
    %v1005 = vrot.slane %v988, %v1004
    %v1006 = vlaneseq
    %v1007 = vshrl.u32 %v1006, 7
    %v1008 = vsub.s32 4, %v1007
    %v1009 = vrot.slane %v988, %v1008
    %v1010 = vlaneseq
    %v1011 = vshrl.u32 %v1010, 7
    %v1012 = vsub.s32 5, %v1011
    %v1013 = vrot.slane %v988, %v1012
    %v1014 = vlaneseq
    %v1015 = vshrl.u32 %v1014, 7
    %v1016 = vsub.s32 6, %v1015
    %v1017 = vrot.slane %v988, %v1016
    %v1281 = vunpack.c.l.b16 %v732
    %v1282 = vunpack.c.h.b16 %v732
    %v1283 = vunpack.c.l.b16 %v733
    %v1284 = vunpack.c.h.b16 %v733
    %v1285 = vunpack.c.l.b16 %v734
    %v1286 = vunpack.c.h.b16 %v734
    %v1287 = vunpack.c.l.b16 %v735
    %v1288 = vunpack.c.l.b16 %v736
    %v1289 = vunpack.c.h.b16 %v736
    %v1290 = vunpack.c.l.b16 %v737
    %v1291 = vunpack.c.h.b16 %v737
    %v1292 = vunpack.c.l.b16 %v738
    %v1293 = vunpack.c.h.b16 %v738
    %v1294 = vunpack.c.l.b16 %v739
    %v1295 = vunpack.c.l.b16 %v740
    %v1296 = vunpack.c.h.b16 %v740
    %v1297 = vunpack.c.l.b16 %v741
    %v1298 = vunpack.c.h.b16 %v741
    %v1299 = vunpack.c.l.b16 %v742
    %v1300 = vunpack.c.h.b16 %v742
    %v1301 = vunpack.c.l.b16 %v743
    %v1302 = vunpack.c.l.b16 %v744
    %v1303 = vunpack.c.h.b16 %v744
    %v1304 = vunpack.c.l.b16 %v745
    %v1305 = vunpack.c.h.b16 %v745
    %v1306 = vunpack.c.l.b16 %v746
    %v1307 = vunpack.c.h.b16 %v746
    %v1308 = vunpack.c.l.b16 %v747
    %v1309 = vunpack.c.l.b16 %v748
    %v1310 = vunpack.c.h.b16 %v748
    %v1311 = vunpack.c.l.b16 %v749
    %v1312 = vunpack.c.h.b16 %v749
    %v1313 = vunpack.c.l.b16 %v750
    %v1314 = vunpack.c.h.b16 %v750
    %v1315 = vunpack.c.l.b16 %v751
    %v1316 = vunpack.c.l.b16 %v752
    %v1317 = vunpack.c.h.b16 %v752
    %v1318 = vunpack.c.l.b16 %v753
    %v1319 = vunpack.c.h.b16 %v753
    %v1320 = vunpack.c.l.b16 %v754
    %v1321 = vunpack.c.h.b16 %v754
    %v1322 = vunpack.c.l.b16 %v755
    %v1323 = vunpack.c.l.b16 %v756
    %v1324 = vunpack.c.h.b16 %v756
    %v1325 = vunpack.c.l.b16 %v757
    %v1326 = vunpack.c.h.b16 %v757
    %v1327 = vunpack.c.l.b16 %v758
    %v1328 = vunpack.c.h.b16 %v758
    %v1329 = vunpack.c.l.b16 %v759
    %v1330 = vunpack.c.l.b16 %v760
    %v1331 = vunpack.c.h.b16 %v760
    %v1332 = vunpack.c.l.b16 %v761
    %v1333 = vunpack.c.h.b16 %v761
    %v1334 = vunpack.c.l.b16 %v762
    %v1335 = vunpack.c.h.b16 %v762
    %v1336 = vunpack.c.l.b16 %v763
    %v1337 = vunpack.c.l.b16 %v764
    %v1338 = vunpack.c.h.b16 %v764
    %v1339 = vunpack.c.l.b16 %v765
    %v1340 = vunpack.c.h.b16 %v765
    %v1341 = vunpack.c.l.b16 %v766
    %v1342 = vunpack.c.h.b16 %v766
    %v1343 = vunpack.c.l.b16 %v767
    %v1344 = vunpack.c.l.b16 %v768
    %v1345 = vunpack.c.h.b16 %v768
    %v1346 = vunpack.c.l.b16 %v769
    %v1347 = vunpack.c.h.b16 %v769
    %v1348 = vunpack.c.l.b16 %v770
    %v1349 = vunpack.c.h.b16 %v770
    %v1350 = vunpack.c.l.b16 %v771
    %v1351 = vunpack.c.l.b16 %v772
    %v1352 = vunpack.c.h.b16 %v772
    %v1353 = vunpack.c.l.b16 %v773
    %v1354 = vunpack.c.h.b16 %v773
    %v1355 = vunpack.c.l.b16 %v774
    %v1356 = vunpack.c.h.b16 %v774
    %v1357 = vunpack.c.l.b16 %v775
    %v1358 = vunpack.c.l.b16 %v776
    %v1359 = vunpack.c.h.b16 %v776
    %v1360 = vunpack.c.l.b16 %v777
    %v1361 = vunpack.c.h.b16 %v777
    %v1362 = vunpack.c.l.b16 %v778
    %v1363 = vunpack.c.h.b16 %v778
    %v1364 = vunpack.c.l.b16 %v779
    %v1365 = vunpack.c.l.b16 %v780
    %v1366 = vunpack.c.h.b16 %v780
    %v1367 = vunpack.c.l.b16 %v781
    %v1368 = vunpack.c.h.b16 %v781
    %v1369 = vunpack.c.l.b16 %v782
    %v1370 = vunpack.c.h.b16 %v782
    %v1371 = vunpack.c.l.b16 %v783
    %v1372 = vunpack.c.l.b16 %v784
    %v1373 = vunpack.c.h.b16 %v784
    %v1374 = vunpack.c.l.b16 %v785
    %v1375 = vunpack.c.h.b16 %v785
    %v1376 = vunpack.c.l.b16 %v786
    %v1377 = vunpack.c.h.b16 %v786
    %v1378 = vunpack.c.l.b16 %v787
    %v1379 = vunpack.c.l.b16 %v788
    %v1380 = vunpack.c.h.b16 %v788
    %v1381 = vunpack.c.l.b16 %v789
    %v1382 = vunpack.c.h.b16 %v789
    %v1383 = vunpack.c.l.b16 %v790
    %v1384 = vunpack.c.h.b16 %v790
    %v1385 = vunpack.c.l.b16 %v791
    %v1386 = vunpack.c.l.b16 %v792
    %v1387 = vunpack.c.h.b16 %v792
    %v1388 = vunpack.c.l.b16 %v793
    %v1389 = vunpack.c.h.b16 %v793
    %v1390 = vunpack.c.l.b16 %v794
    %v1391 = vunpack.c.h.b16 %v794
    %v1392 = vunpack.c.l.b16 %v795
    %v1393 = vunpack.c.l.b16 %v796
    %v1394 = vunpack.c.h.b16 %v796
    %v1395 = vunpack.c.l.b16 %v797
    %v1396 = vunpack.c.h.b16 %v797
    %v1397 = vunpack.c.l.b16 %v798
    %v1398 = vunpack.c.h.b16 %v798
    %v1399 = vunpack.c.l.b16 %v799
    %v1400 = vunpack.c.l.b16 %v800
    %v1401 = vunpack.c.h.b16 %v800
    %v1402 = vunpack.c.l.b16 %v801
    %v1403 = vunpack.c.h.b16 %v801
    %v1404 = vunpack.c.l.b16 %v802
    %v1405 = vunpack.c.h.b16 %v802
    %v1406 = vunpack.c.l.b16 %v803
    %v1407 = vunpack.c.l.b16 %v804
    %v1408 = vunpack.c.h.b16 %v804
    %v1409 = vunpack.c.l.b16 %v805
    %v1410 = vunpack.c.h.b16 %v805
    %v1411 = vunpack.c.l.b16 %v806
    %v1412 = vunpack.c.h.b16 %v806
    %v1413 = vunpack.c.l.b16 %v807
    %v1414 = vunpack.c.l.b16 %v808
    %v1415 = vunpack.c.h.b16 %v808
    %v1416 = vunpack.c.l.b16 %v809
    %v1417 = vunpack.c.h.b16 %v809
    %v1418 = vunpack.c.l.b16 %v810
    %v1419 = vunpack.c.h.b16 %v810
    %v1420 = vunpack.c.l.b16 %v811
    %v1421 = vunpack.c.l.b16 %v812
    %v1422 = vunpack.c.h.b16 %v812
    %v1423 = vunpack.c.l.b16 %v813
    %v1424 = vunpack.c.h.b16 %v813
    %v1425 = vunpack.c.l.b16 %v814
    %v1426 = vunpack.c.h.b16 %v814
    %v1427 = vunpack.c.l.b16 %v815
    %v1428 = vunpack.c.l.b16 %v816
    %v1429 = vunpack.c.h.b16 %v816
    %v1430 = vunpack.c.l.b16 %v817
    %v1431 = vunpack.c.h.b16 %v817
    %v1432 = vunpack.c.l.b16 %v818
    %v1433 = vunpack.c.h.b16 %v818
    %v1434 = vunpack.c.l.b16 %v819
    %v1435 = vunpack.c.l.b16 %v820
    %v1436 = vunpack.c.h.b16 %v820
    %v1437 = vunpack.c.l.b16 %v821
    %v1438 = vunpack.c.h.b16 %v821
    %v1439 = vunpack.c.l.b16 %v822
    %v1440 = vunpack.c.h.b16 %v822
    %v1441 = vunpack.c.l.b16 %v823
    %v1442 = vunpack.c.l.b16 %v824
    %v1443 = vunpack.c.h.b16 %v824
    %v1444 = vunpack.c.l.b16 %v825
    %v1445 = vunpack.c.h.b16 %v825
    %v1446 = vunpack.c.l.b16 %v826
    %v1447 = vunpack.c.h.b16 %v826
    %v1448 = vunpack.c.l.b16 %v827
    %v1449 = vunpack.c.l.b16 %v828
    %v1450 = vunpack.c.h.b16 %v828
    %v1451 = vunpack.c.l.b16 %v829
    %v1452 = vunpack.c.h.b16 %v829
    %v1453 = vunpack.c.l.b16 %v830
    %v1454 = vunpack.c.h.b16 %v830
    %v1455 = vunpack.c.l.b16 %v831
    %v1456 = vunpack.c.l.b16 %v832
    %v1457 = vunpack.c.h.b16 %v832
    %v1458 = vunpack.c.l.b16 %v833
    %v1459 = vunpack.c.h.b16 %v833
    %v1460 = vunpack.c.l.b16 %v834
    %v1461 = vunpack.c.h.b16 %v834
    %v1462 = vunpack.c.l.b16 %v835
    %v1463 = vunpack.c.l.b16 %v836
    %v1464 = vunpack.c.h.b16 %v836
    %v1465 = vunpack.c.l.b16 %v837
    %v1466 = vunpack.c.h.b16 %v837
    %v1467 = vunpack.c.l.b16 %v838
    %v1468 = vunpack.c.h.b16 %v838
    %v1469 = vunpack.c.l.b16 %v839
    %v1470 = vunpack.c.l.b16 %v840
    %v1471 = vunpack.c.h.b16 %v840
    %v1472 = vunpack.c.l.b16 %v841
    %v1473 = vunpack.c.h.b16 %v841
    %v1474 = vunpack.c.l.b16 %v842
    %v1475 = vunpack.c.h.b16 %v842
    %v1476 = vunpack.c.l.b16 %v843
    %v1477 = vunpack.c.l.b16 %v844
    %v1478 = vunpack.c.h.b16 %v844
    %v1479 = vunpack.c.l.b16 %v845
    %v1480 = vunpack.c.h.b16 %v845
    %v1481 = vunpack.c.l.b16 %v846
    %v1482 = vunpack.c.h.b16 %v846
    %v1483 = vunpack.c.l.b16 %v847
    %v1484 = vunpack.c.l.b16 %v848
    %v1485 = vunpack.c.h.b16 %v848
    %v1486 = vunpack.c.l.b16 %v849
    %v1487 = vunpack.c.h.b16 %v849
    %v1488 = vunpack.c.l.b16 %v850
    %v1489 = vunpack.c.h.b16 %v850
    %v1490 = vunpack.c.l.b16 %v851
    %v1491 = vunpack.c.l.b16 %v852
    %v1492 = vunpack.c.h.b16 %v852
    %v1493 = vunpack.c.l.b16 %v853
    %v1494 = vunpack.c.h.b16 %v853
    %v1495 = vunpack.c.l.b16 %v854
    %v1496 = vunpack.c.h.b16 %v854
    %v1497 = vunpack.c.l.b16 %v855
    %v1498 = vunpack.c.l.b16 %v856
    %v1499 = vunpack.c.h.b16 %v856
    %v1500 = vunpack.c.l.b16 %v857
    %v1501 = vunpack.c.h.b16 %v857
    %v1502 = vunpack.c.l.b16 %v858
    %v1503 = vunpack.c.h.b16 %v858
    %v1504 = vunpack.c.l.b16 %v859
    %v1505 = vunpack.c.l.b16 %v860
    %v1506 = vunpack.c.h.b16 %v860
    %v1507 = vunpack.c.l.b16 %v861
    %v1508 = vunpack.c.h.b16 %v861
    %v1509 = vunpack.c.l.b16 %v862
    %v1510 = vunpack.c.h.b16 %v862
    %v1511 = vunpack.c.l.b16 %v863
    %v1512 = vunpack.c.l.b16 %v864
    %v1513 = vunpack.c.h.b16 %v864
    %v1514 = vunpack.c.l.b16 %v865
    %v1515 = vunpack.c.h.b16 %v865
    %v1516 = vunpack.c.l.b16 %v866
    %v1517 = vunpack.c.h.b16 %v866
    %v1518 = vunpack.c.l.b16 %v867
    %v1519 = vunpack.c.l.b16 %v868
    %v1520 = vunpack.c.h.b16 %v868
    %v1521 = vunpack.c.l.b16 %v869
    %v1522 = vunpack.c.h.b16 %v869
    %v1523 = vunpack.c.l.b16 %v870
    %v1524 = vunpack.c.h.b16 %v870
    %v1525 = vunpack.c.l.b16 %v871
    %v1526 = vunpack.c.l.b16 %v872
    %v1527 = vunpack.c.h.b16 %v872
    %v1528 = vunpack.c.l.b16 %v873
    %v1529 = vunpack.c.h.b16 %v873
    %v1530 = vunpack.c.l.b16 %v874
    %v1531 = vunpack.c.h.b16 %v874
    %v1532 = vunpack.c.l.b16 %v875
    %v1533 = vunpack.c.l.b16 %v876
    %v1534 = vunpack.c.h.b16 %v876
    %v1535 = vunpack.c.l.b16 %v877
    %v1536 = vunpack.c.h.b16 %v877
    %v1537 = vunpack.c.l.b16 %v878
    %v1538 = vunpack.c.h.b16 %v878
    %v1539 = vunpack.c.l.b16 %v879
    %v1540 = vunpack.c.l.b16 %v880
    %v1541 = vunpack.c.h.b16 %v880
    %v1542 = vunpack.c.l.b16 %v881
    %v1543 = vunpack.c.h.b16 %v881
    %v1544 = vunpack.c.l.b16 %v882
    %v1545 = vunpack.c.h.b16 %v882
    %v1546 = vunpack.c.l.b16 %v883
    %v1547 = vunpack.c.l.b16 %v884
    %v1548 = vunpack.c.h.b16 %v884
    %v1549 = vunpack.c.l.b16 %v885
    %v1550 = vunpack.c.h.b16 %v885
    %v1551 = vunpack.c.l.b16 %v886
    %v1552 = vunpack.c.h.b16 %v886
    %v1553 = vunpack.c.l.b16 %v887
    %v1554 = vunpack.c.l.b16 %v888
    %v1555 = vunpack.c.h.b16 %v888
    %v1556 = vunpack.c.l.b16 %v889
    %v1557 = vunpack.c.h.b16 %v889
    %v1558 = vunpack.c.l.b16 %v890
    %v1559 = vunpack.c.h.b16 %v890
    %v1560 = vunpack.c.l.b16 %v891
    %v1561 = vunpack.c.l.b16 %v892
    %v1562 = vunpack.c.h.b16 %v892
    %v1563 = vunpack.c.l.b16 %v893
    %v1564 = vunpack.c.h.b16 %v893
    %v1565 = vunpack.c.l.b16 %v894
    %v1566 = vunpack.c.h.b16 %v894
    %v1567 = vunpack.c.l.b16 %v895
    %v1568 = vunpack.c.l.b16 %v896
    %v1569 = vunpack.c.h.b16 %v896
    %v1570 = vunpack.c.l.b16 %v897
    %v1571 = vunpack.c.h.b16 %v897
    %v1572 = vunpack.c.l.b16 %v898
    %v1573 = vunpack.c.h.b16 %v898
    %v1574 = vunpack.c.l.b16 %v899
    %v1575 = vunpack.c.l.b16 %v900
    %v1576 = vunpack.c.h.b16 %v900
    %v1577 = vunpack.c.l.b16 %v901
    %v1578 = vunpack.c.h.b16 %v901
    %v1579 = vunpack.c.l.b16 %v902
    %v1580 = vunpack.c.h.b16 %v902
    %v1581 = vunpack.c.l.b16 %v903
    %v1582 = vunpack.c.l.b16 %v904
    %v1583 = vunpack.c.h.b16 %v904
    %v1584 = vunpack.c.l.b16 %v905
    %v1585 = vunpack.c.h.b16 %v905
    %v1586 = vunpack.c.l.b16 %v906
    %v1587 = vunpack.c.h.b16 %v906
    %v1588 = vunpack.c.l.b16 %v907
    %v1589 = vunpack.c.l.b16 %v908
    %v1590 = vunpack.c.h.b16 %v908
    %v1591 = vunpack.c.l.b16 %v909
    %v1592 = vunpack.c.h.b16 %v909
    %v1593 = vunpack.c.l.b16 %v910
    %v1594 = vunpack.c.h.b16 %v910
    %v1595 = vunpack.c.l.b16 %v911
    %v1596 = vunpack.c.l.b16 %v912
    %v1597 = vunpack.c.h.b16 %v912
    %v1598 = vunpack.c.l.b16 %v913
    %v1599 = vunpack.c.h.b16 %v913
    %v1600 = vunpack.c.l.b16 %v914
    %v1601 = vunpack.c.h.b16 %v914
    %v1602 = vunpack.c.l.b16 %v915
    %v1603 = vunpack.c.l.b16 %v916
    %v1604 = vunpack.c.h.b16 %v916
    %v1605 = vunpack.c.l.b16 %v917
    %v1606 = vunpack.c.h.b16 %v917
    %v1607 = vunpack.c.l.b16 %v918
    %v1608 = vunpack.c.h.b16 %v918
    %v1609 = vunpack.c.l.b16 %v919
    %v1610 = vunpack.c.l.b16 %v920
    %v1611 = vunpack.c.h.b16 %v920
    %v1612 = vunpack.c.l.b16 %v921
    %v1613 = vunpack.c.h.b16 %v921
    %v1614 = vunpack.c.l.b16 %v922
    %v1615 = vunpack.c.h.b16 %v922
    %v1616 = vunpack.c.l.b16 %v923
    %v1617 = vunpack.c.l.b16 %v924
    %v1618 = vunpack.c.h.b16 %v924
    %v1619 = vunpack.c.l.b16 %v925
    %v1620 = vunpack.c.h.b16 %v925
    %v1621 = vunpack.c.l.b16 %v926
    %v1622 = vunpack.c.h.b16 %v926
    %v1623 = vunpack.c.l.b16 %v927
    %v1624 = vunpack.c.l.b16 %v928
    %v1625 = vunpack.c.h.b16 %v928
    %v1626 = vunpack.c.l.b16 %v929
    %v1627 = vunpack.c.h.b16 %v929
    %v1628 = vunpack.c.l.b16 %v930
    %v1629 = vunpack.c.h.b16 %v930
    %v1630 = vunpack.c.l.b16 %v931
    %v1631 = vunpack.c.l.b16 %v932
    %v1632 = vunpack.c.h.b16 %v932
    %v1633 = vunpack.c.l.b16 %v933
    %v1634 = vunpack.c.h.b16 %v933
    %v1635 = vunpack.c.l.b16 %v934
    %v1636 = vunpack.c.h.b16 %v934
    %v1637 = vunpack.c.l.b16 %v935
    %v1638 = vunpack.c.l.b16 %v936
    %v1639 = vunpack.c.h.b16 %v936
    %v1640 = vunpack.c.l.b16 %v937
    %v1641 = vunpack.c.h.b16 %v937
    %v1642 = vunpack.c.l.b16 %v938
    %v1643 = vunpack.c.h.b16 %v938
    %v1644 = vunpack.c.l.b16 %v939
    %v1645 = vunpack.c.l.b16 %v940
    %v1646 = vunpack.c.h.b16 %v940
    %v1647 = vunpack.c.l.b16 %v941
    %v1648 = vunpack.c.h.b16 %v941
    %v1649 = vunpack.c.l.b16 %v942
    %v1650 = vunpack.c.h.b16 %v942
    %v1651 = vunpack.c.l.b16 %v943
    %v1652 = vunpack.c.l.b16 %v944
    %v1653 = vunpack.c.h.b16 %v944
    %v1654 = vunpack.c.l.b16 %v945
    %v1655 = vunpack.c.h.b16 %v945
    %v1656 = vunpack.c.l.b16 %v946
    %v1657 = vunpack.c.h.b16 %v946
    %v1658 = vunpack.c.l.b16 %v947
    %v1659 = vunpack.c.l.b16 %v948
    %v1660 = vunpack.c.h.b16 %v948
    %v1661 = vunpack.c.l.b16 %v949
    %v1662 = vunpack.c.h.b16 %v949
    %v1663 = vunpack.c.l.b16 %v950
    %v1664 = vunpack.c.h.b16 %v950
    %v1665 = vunpack.c.l.b16 %v951
    %v1666 = vunpack.c.l.b16 %v952
    %v1667 = vunpack.c.h.b16 %v952
    %v1668 = vunpack.c.l.b16 %v953
    %v1669 = vunpack.c.h.b16 %v953
    %v1670 = vunpack.c.l.b16 %v954
    %v1671 = vunpack.c.h.b16 %v954
    %v1672 = vunpack.c.l.b16 %v955
    %v1673 = vunpack.c.l.b16 %v956
    %v1674 = vunpack.c.h.b16 %v956
    %v1675 = vunpack.c.l.b16 %v957
    %v1676 = vunpack.c.h.b16 %v957
    %v1677 = vunpack.c.l.b16 %v958
    %v1678 = vunpack.c.h.b16 %v958
    %v1679 = vunpack.c.l.b16 %v959
    %v1680 = vunpack.c.l.b16 %v960
    %v1681 = vunpack.c.h.b16 %v960
    %v1682 = vunpack.c.l.b16 %v961
    %v1683 = vunpack.c.h.b16 %v961
    %v1684 = vunpack.c.l.b16 %v962
    %v1685 = vunpack.c.h.b16 %v962
    %v1686 = vunpack.c.l.b16 %v963
    %v1687 = vunpack.c.l.b16 %v964
    %v1688 = vunpack.c.h.b16 %v964
    %v1689 = vunpack.c.l.b16 %v965
    %v1690 = vunpack.c.h.b16 %v965
    %v1691 = vunpack.c.l.b16 %v966
    %v1692 = vunpack.c.h.b16 %v966
    %v1693 = vunpack.c.l.b16 %v967
    %v1694 = vunpack.c.l.b16 %v968
    %v1695 = vunpack.c.h.b16 %v968
    %v1696 = vunpack.c.l.b16 %v969
    %v1697 = vunpack.c.h.b16 %v969
    %v1698 = vunpack.c.l.b16 %v970
    %v1699 = vunpack.c.h.b16 %v970
    %v1700 = vunpack.c.l.b16 %v971
    %v1701 = vunpack.c.l.b16 %v972
    %v1702 = vunpack.c.h.b16 %v972
    %v1703 = vunpack.c.l.b16 %v973
    %v1704 = vunpack.c.h.b16 %v973
    %v1705 = vunpack.c.l.b16 %v974
    %v1706 = vunpack.c.h.b16 %v974
    %v1707 = vunpack.c.l.b16 %v975
    %v1708 = vunpack.c.l.b16 %v976
    %v1709 = vunpack.c.h.b16 %v976
    %v1710 = vunpack.c.l.b16 %v977
    %v1711 = vunpack.c.h.b16 %v977
    %v1712 = vunpack.c.l.b16 %v978
    %v1713 = vunpack.c.h.b16 %v978
    %v1714 = vunpack.c.l.b16 %v979
    %v1715 = vunpack.c.l.b16 %v980
    %v1716 = vunpack.c.h.b16 %v980
    %v1717 = vunpack.c.l.b16 %v981
    %v1718 = vunpack.c.h.b16 %v981
    %v1719 = vunpack.c.l.b16 %v982
    %v1720 = vunpack.c.h.b16 %v982
    %v1721 = vunpack.c.l.b16 %v983
    %v1722 = vunpack.c.l.b16 %v984
    %v1723 = vunpack.c.h.b16 %v984
    %v1724 = vunpack.c.l.b16 %v985
    %v1725 = vunpack.c.h.b16 %v985
    %v1726 = vunpack.c.l.b16 %v986
    %v1727 = vunpack.c.h.b16 %v986
    %v1728 = vunpack.c.l.b16 %v987
    %v1729 = vpack.c.b16 %v1288, %v1281
    %v1730 = vpack.c.b16 %v1289, %v1282
    %v1731 = vpack.c.b16 %v1290, %v1283
    %v1732 = vpack.c.b16 %v1291, %v1284
    %v1733 = vpack.c.b16 %v1292, %v1285
    %v1734 = vpack.c.b16 %v1293, %v1286
    %v1735 = vpack.c.b16 %v1294, %v1287
    %v1736 = vpack.c.b16 %v1302, %v1295
    %v1737 = vpack.c.b16 %v1303, %v1296
    %v1738 = vpack.c.b16 %v1304, %v1297
    %v1739 = vpack.c.b16 %v1305, %v1298
    %v1740 = vpack.c.b16 %v1306, %v1299
    %v1741 = vpack.c.b16 %v1307, %v1300
    %v1742 = vpack.c.b16 %v1308, %v1301
    %v1743 = vpack.c.b16 %v1316, %v1309
    %v1744 = vpack.c.b16 %v1317, %v1310
    %v1745 = vpack.c.b16 %v1318, %v1311
    %v1746 = vpack.c.b16 %v1319, %v1312
    %v1747 = vpack.c.b16 %v1320, %v1313
    %v1748 = vpack.c.b16 %v1321, %v1314
    %v1749 = vpack.c.b16 %v1322, %v1315
    %v1750 = vpack.c.b16 %v1330, %v1323
    %v1751 = vpack.c.b16 %v1331, %v1324
    %v1752 = vpack.c.b16 %v1332, %v1325
    %v1753 = vpack.c.b16 %v1333, %v1326
    %v1754 = vpack.c.b16 %v1334, %v1327
    %v1755 = vpack.c.b16 %v1335, %v1328
    %v1756 = vpack.c.b16 %v1336, %v1329
    %v1757 = vpack.c.b16 %v1344, %v1337
    %v1758 = vpack.c.b16 %v1345, %v1338
    %v1759 = vpack.c.b16 %v1346, %v1339
    %v1760 = vpack.c.b16 %v1347, %v1340
    %v1761 = vpack.c.b16 %v1348, %v1341
    %v1762 = vpack.c.b16 %v1349, %v1342
    %v1763 = vpack.c.b16 %v1350, %v1343
    %v1764 = vpack.c.b16 %v1358, %v1351
    %v1765 = vpack.c.b16 %v1359, %v1352
    %v1766 = vpack.c.b16 %v1360, %v1353
    %v1767 = vpack.c.b16 %v1361, %v1354
    %v1768 = vpack.c.b16 %v1362, %v1355
    %v1769 = vpack.c.b16 %v1363, %v1356
    %v1770 = vpack.c.b16 %v1364, %v1357
    %v1771 = vpack.c.b16 %v1372, %v1365
    %v1772 = vpack.c.b16 %v1373, %v1366
    %v1773 = vpack.c.b16 %v1374, %v1367
    %v1774 = vpack.c.b16 %v1375, %v1368
    %v1775 = vpack.c.b16 %v1376, %v1369
    %v1776 = vpack.c.b16 %v1377, %v1370
    %v1777 = vpack.c.b16 %v1378, %v1371
    %v1778 = vpack.c.b16 %v1386, %v1379
    %v1779 = vpack.c.b16 %v1387, %v1380
    %v1780 = vpack.c.b16 %v1388, %v1381
    %v1781 = vpack.c.b16 %v1389, %v1382
    %v1782 = vpack.c.b16 %v1390, %v1383
    %v1783 = vpack.c.b16 %v1391, %v1384
    %v1784 = vpack.c.b16 %v1392, %v1385
    %v1785 = vpack.c.b16 %v1400, %v1393
    %v1786 = vpack.c.b16 %v1401, %v1394
    %v1787 = vpack.c.b16 %v1402, %v1395
    %v1788 = vpack.c.b16 %v1403, %v1396
    %v1789 = vpack.c.b16 %v1404, %v1397
    %v1790 = vpack.c.b16 %v1405, %v1398
    %v1791 = vpack.c.b16 %v1406, %v1399
    %v1792 = vpack.c.b16 %v1414, %v1407
    %v1793 = vpack.c.b16 %v1415, %v1408
    %v1794 = vpack.c.b16 %v1416, %v1409
    %v1795 = vpack.c.b16 %v1417, %v1410
    %v1796 = vpack.c.b16 %v1418, %v1411
    %v1797 = vpack.c.b16 %v1419, %v1412
    %v1798 = vpack.c.b16 %v1420, %v1413
    %v1799 = vpack.c.b16 %v1428, %v1421
    %v1800 = vpack.c.b16 %v1429, %v1422
    %v1801 = vpack.c.b16 %v1430, %v1423
    %v1802 = vpack.c.b16 %v1431, %v1424
    %v1803 = vpack.c.b16 %v1432, %v1425
    %v1804 = vpack.c.b16 %v1433, %v1426
    %v1805 = vpack.c.b16 %v1434, %v1427
    %v1806 = vpack.c.b16 %v1442, %v1435
    %v1807 = vpack.c.b16 %v1443, %v1436
    %v1808 = vpack.c.b16 %v1444, %v1437
    %v1809 = vpack.c.b16 %v1445, %v1438
    %v1810 = vpack.c.b16 %v1446, %v1439
    %v1811 = vpack.c.b16 %v1447, %v1440
    %v1812 = vpack.c.b16 %v1448, %v1441
    %v1813 = vpack.c.b16 %v1456, %v1449
    %v1814 = vpack.c.b16 %v1457, %v1450
    %v1815 = vpack.c.b16 %v1458, %v1451
    %v1816 = vpack.c.b16 %v1459, %v1452
    %v1817 = vpack.c.b16 %v1460, %v1453
    %v1818 = vpack.c.b16 %v1461, %v1454
    %v1819 = vpack.c.b16 %v1462, %v1455
    %v1820 = vpack.c.b16 %v1470, %v1463
    %v1821 = vpack.c.b16 %v1471, %v1464
    %v1822 = vpack.c.b16 %v1472, %v1465
    %v1823 = vpack.c.b16 %v1473, %v1466
    %v1824 = vpack.c.b16 %v1474, %v1467
    %v1825 = vpack.c.b16 %v1475, %v1468
    %v1826 = vpack.c.b16 %v1476, %v1469
    %v1827 = vpack.c.b16 %v1484, %v1477
    %v1828 = vpack.c.b16 %v1485, %v1478
    %v1829 = vpack.c.b16 %v1486, %v1479
    %v1830 = vpack.c.b16 %v1487, %v1480
    %v1831 = vpack.c.b16 %v1488, %v1481
    %v1832 = vpack.c.b16 %v1489, %v1482
    %v1833 = vpack.c.b16 %v1490, %v1483
    %v1834 = vpack.c.b16 %v1498, %v1491
    %v1835 = vpack.c.b16 %v1499, %v1492
    %v1836 = vpack.c.b16 %v1500, %v1493
    %v1837 = vpack.c.b16 %v1501, %v1494
    %v1838 = vpack.c.b16 %v1502, %v1495
    %v1839 = vpack.c.b16 %v1503, %v1496
    %v1840 = vpack.c.b16 %v1504, %v1497
    %v1841 = vpack.c.b16 %v1512, %v1505
    %v1842 = vpack.c.b16 %v1513, %v1506
    %v1843 = vpack.c.b16 %v1514, %v1507
    %v1844 = vpack.c.b16 %v1515, %v1508
    %v1845 = vpack.c.b16 %v1516, %v1509
    %v1846 = vpack.c.b16 %v1517, %v1510
    %v1847 = vpack.c.b16 %v1518, %v1511
    %v1848 = vpack.c.b16 %v1526, %v1519
    %v1849 = vpack.c.b16 %v1527, %v1520
    %v1850 = vpack.c.b16 %v1528, %v1521
    %v1851 = vpack.c.b16 %v1529, %v1522
    %v1852 = vpack.c.b16 %v1530, %v1523
    %v1853 = vpack.c.b16 %v1531, %v1524
    %v1854 = vpack.c.b16 %v1532, %v1525
    %v1855 = vpack.c.b16 %v1540, %v1533
    %v1856 = vpack.c.b16 %v1541, %v1534
    %v1857 = vpack.c.b16 %v1542, %v1535
    %v1858 = vpack.c.b16 %v1543, %v1536
    %v1859 = vpack.c.b16 %v1544, %v1537
    %v1860 = vpack.c.b16 %v1545, %v1538
    %v1861 = vpack.c.b16 %v1546, %v1539
    %v1862 = vpack.c.b16 %v1554, %v1547
    %v1863 = vpack.c.b16 %v1555, %v1548
    %v1864 = vpack.c.b16 %v1556, %v1549
    %v1865 = vpack.c.b16 %v1557, %v1550
    %v1866 = vpack.c.b16 %v1558, %v1551
    %v1867 = vpack.c.b16 %v1559, %v1552
    %v1868 = vpack.c.b16 %v1560, %v1553
    %v1869 = vpack.c.b16 %v1568, %v1561
    %v1870 = vpack.c.b16 %v1569, %v1562
    %v1871 = vpack.c.b16 %v1570, %v1563
    %v1872 = vpack.c.b16 %v1571, %v1564
    %v1873 = vpack.c.b16 %v1572, %v1565
    %v1874 = vpack.c.b16 %v1573, %v1566
    %v1875 = vpack.c.b16 %v1574, %v1567
    %v1876 = vpack.c.b16 %v1582, %v1575
    %v1877 = vpack.c.b16 %v1583, %v1576
    %v1878 = vpack.c.b16 %v1584, %v1577
    %v1879 = vpack.c.b16 %v1585, %v1578
    %v1880 = vpack.c.b16 %v1586, %v1579
    %v1881 = vpack.c.b16 %v1587, %v1580
    %v1882 = vpack.c.b16 %v1588, %v1581
    %v1883 = vpack.c.b16 %v1596, %v1589
    %v1884 = vpack.c.b16 %v1597, %v1590
    %v1885 = vpack.c.b16 %v1598, %v1591
    %v1886 = vpack.c.b16 %v1599, %v1592
    %v1887 = vpack.c.b16 %v1600, %v1593
    %v1888 = vpack.c.b16 %v1601, %v1594
    %v1889 = vpack.c.b16 %v1602, %v1595
    %v1890 = vpack.c.b16 %v1610, %v1603
    %v1891 = vpack.c.b16 %v1611, %v1604
    %v1892 = vpack.c.b16 %v1612, %v1605
    %v1893 = vpack.c.b16 %v1613, %v1606
    %v1894 = vpack.c.b16 %v1614, %v1607
    %v1895 = vpack.c.b16 %v1615, %v1608
    %v1896 = vpack.c.b16 %v1616, %v1609
    %v1897 = vpack.c.b16 %v1624, %v1617
    %v1898 = vpack.c.b16 %v1625, %v1618
    %v1899 = vpack.c.b16 %v1626, %v1619
    %v1900 = vpack.c.b16 %v1627, %v1620
    %v1901 = vpack.c.b16 %v1628, %v1621
    %v1902 = vpack.c.b16 %v1629, %v1622
    %v1903 = vpack.c.b16 %v1630, %v1623
    %v1904 = vpack.c.b16 %v1638, %v1631
    %v1905 = vpack.c.b16 %v1639, %v1632
    %v1906 = vpack.c.b16 %v1640, %v1633
    %v1907 = vpack.c.b16 %v1641, %v1634
    %v1908 = vpack.c.b16 %v1642, %v1635
    %v1909 = vpack.c.b16 %v1643, %v1636
    %v1910 = vpack.c.b16 %v1644, %v1637
    %v1911 = vpack.c.b16 %v1652, %v1645
    %v1912 = vpack.c.b16 %v1653, %v1646
    %v1913 = vpack.c.b16 %v1654, %v1647
    %v1914 = vpack.c.b16 %v1655, %v1648
    %v1915 = vpack.c.b16 %v1656, %v1649
    %v1916 = vpack.c.b16 %v1657, %v1650
    %v1917 = vpack.c.b16 %v1658, %v1651
    %v1918 = vpack.c.b16 %v1666, %v1659
    %v1919 = vpack.c.b16 %v1667, %v1660
    %v1920 = vpack.c.b16 %v1668, %v1661
    %v1921 = vpack.c.b16 %v1669, %v1662
    %v1922 = vpack.c.b16 %v1670, %v1663
    %v1923 = vpack.c.b16 %v1671, %v1664
    %v1924 = vpack.c.b16 %v1672, %v1665
    %v1925 = vpack.c.b16 %v1680, %v1673
    %v1926 = vpack.c.b16 %v1681, %v1674
    %v1927 = vpack.c.b16 %v1682, %v1675
    %v1928 = vpack.c.b16 %v1683, %v1676
    %v1929 = vpack.c.b16 %v1684, %v1677
    %v1930 = vpack.c.b16 %v1685, %v1678
    %v1931 = vpack.c.b16 %v1686, %v1679
    %v1932 = vpack.c.b16 %v1694, %v1687
    %v1933 = vpack.c.b16 %v1695, %v1688
    %v1934 = vpack.c.b16 %v1696, %v1689
    %v1935 = vpack.c.b16 %v1697, %v1690
    %v1936 = vpack.c.b16 %v1698, %v1691
    %v1937 = vpack.c.b16 %v1699, %v1692
    %v1938 = vpack.c.b16 %v1700, %v1693
    %v1939 = vpack.c.b16 %v1708, %v1701
    %v1940 = vpack.c.b16 %v1709, %v1702
    %v1941 = vpack.c.b16 %v1710, %v1703
    %v1942 = vpack.c.b16 %v1711, %v1704
    %v1943 = vpack.c.b16 %v1712, %v1705
    %v1944 = vpack.c.b16 %v1713, %v1706
    %v1945 = vpack.c.b16 %v1714, %v1707
    %v1946 = vpack.c.b16 %v1722, %v1715
    %v1947 = vpack.c.b16 %v1723, %v1716
    %v1948 = vpack.c.b16 %v1724, %v1717
    %v1949 = vpack.c.b16 %v1725, %v1718
    %v1950 = vpack.c.b16 %v1726, %v1719
    %v1951 = vpack.c.b16 %v1727, %v1720
    %v1952 = vpack.c.b16 %v1728, %v1721
    %2177 = vmatprep.subr.bf16.mxu0 %v1730
    %2178 = vmatpush1.bf16.msra.mxu0 %v1729
    %2179 = vmatprep.subr.bf16.mxu0 %v1737
    %2180 = vmatpush1.bf16.msra.mxu0 %v1736
    %2181 = vmatprep.subr.bf16.mxu0 %v1744
    %2182 = vmatpush1.bf16.msra.mxu0 %v1743
    %2183 = vmatprep.subr.bf16.mxu0 %v1751
    %2184 = vmatpush1.bf16.msra.mxu0 %v1750
    %2185 = vmatprep.subr.bf16.mxu0 %v1758
    %2186 = vmatpush1.bf16.msra.mxu0 %v1757
    %2187 = vmatprep.subr.bf16.mxu0 %v1765
    %2188 = vmatpush1.bf16.msra.mxu0 %v1764
    %2189 = vmatprep.subr.bf16.mxu0 %v1772
    %2190 = vmatpush1.bf16.msra.mxu0 %v1771
    %2191 = vmatprep.subr.bf16.mxu0 %v1779
    %2192 = vmatpush1.bf16.msra.mxu0 %v1778
    %2193 = vmatprep.subr.bf16.mxu0 %v1786
    %2194 = vmatpush1.bf16.msra.mxu0 %v1785
    %2195 = vmatprep.subr.bf16.mxu0 %v1793
    %2196 = vmatpush1.bf16.msra.mxu0 %v1792
    %2197 = vmatprep.subr.bf16.mxu0 %v1800
    %2198 = vmatpush1.bf16.msra.mxu0 %v1799
    %2199 = vmatprep.subr.bf16.mxu0 %v1807
    %2200 = vmatpush1.bf16.msra.mxu0 %v1806
    %2201 = vmatprep.subr.bf16.mxu0 %v1814
    %2202 = vmatpush1.bf16.msra.mxu0 %v1813
    %2203 = vmatprep.subr.bf16.mxu0 %v1821
    %2204 = vmatpush1.bf16.msra.mxu0 %v1820
    %2205 = vmatprep.subr.bf16.mxu0 %v1828
    %2206 = vmatpush1.bf16.msra.mxu0 %v1827
    %2207 = vmatprep.subr.bf16.mxu0 %v1835
    %2208 = vmatpush1.bf16.msra.mxu0 %v1834
    %2209 = vmatprep.mubr.bf16.mxu0 %v729
    %2210 = vmatmul.mubr.bf16.gmra.mrb[0].mxu0 %v728
    %v2211 = vpop.f32.mrb[0].mxu0
    %v2212 = vadd.f32 %v993, %v2211
    %v2213 = vpop.f32.mrb[0].mxu0
    %v2214 = vadd.f32 %v997, %v2213
    %v2215 = vpop.f32.mrb[0].mxu0
    %v2216 = vpop.f32.mrb[0].mxu0
    %2217 = vdwg.mxu0
    %2218 = vmatprep.subr.bf16.mxu0 %v1842
    %2219 = vmatpush1.bf16.msra.mxu0 %v1841
    %2220 = vmatprep.subr.bf16.mxu0 %v1849
    %2221 = vmatpush1.bf16.msra.mxu0 %v1848
    %2222 = vmatprep.subr.bf16.mxu0 %v1856
    %2223 = vmatpush1.bf16.msra.mxu0 %v1855
    %2224 = vmatprep.subr.bf16.mxu0 %v1863
    %2225 = vmatpush1.bf16.msra.mxu0 %v1862
    %2226 = vmatprep.subr.bf16.mxu0 %v1870
    %2227 = vmatpush1.bf16.msra.mxu0 %v1869
    %2228 = vmatprep.subr.bf16.mxu0 %v1877
    %2229 = vmatpush1.bf16.msra.mxu0 %v1876
    %2230 = vmatprep.subr.bf16.mxu0 %v1884
    %2231 = vmatpush1.bf16.msra.mxu0 %v1883
    %2232 = vmatprep.subr.bf16.mxu0 %v1891
    %2233 = vmatpush1.bf16.msra.mxu0 %v1890
    %2234 = vmatprep.subr.bf16.mxu0 %v1898
    %2235 = vmatpush1.bf16.msra.mxu0 %v1897
    %2236 = vmatprep.subr.bf16.mxu0 %v1905
    %2237 = vmatpush1.bf16.msra.mxu0 %v1904
    %2238 = vmatprep.subr.bf16.mxu0 %v1912
    %2239 = vmatpush1.bf16.msra.mxu0 %v1911
    %2240 = vmatprep.subr.bf16.mxu0 %v1919
    %2241 = vmatpush1.bf16.msra.mxu0 %v1918
    %2242 = vmatprep.subr.bf16.mxu0 %v1926
    %2243 = vmatpush1.bf16.msra.mxu0 %v1925
    %2244 = vmatprep.subr.bf16.mxu0 %v1933
    %2245 = vmatpush1.bf16.msra.mxu0 %v1932
    %2246 = vmatprep.subr.bf16.mxu0 %v1940
    %2247 = vmatpush1.bf16.msra.mxu0 %v1939
    %2248 = vmatprep.subr.bf16.mxu0 %v1947
    %2249 = vmatpush1.bf16.msra.mxu0 %v1946
    %2250 = vmatprep.mubr.bf16.mxu0 %v731
    %2251 = vmatmul.mubr.bf16.gmra.mrb[0].mxu0 %v730
    %v2252 = vpop.f32.mrb[0].mxu0
    %v2253 = vadd.f32 %v2212, %v2252
    %v2254 = vpop.f32.mrb[0].mxu0
    %v2255 = vadd.f32 %v2214, %v2254
    %v2256 = vpop.f32.mrb[0].mxu0
    %v2257 = vpop.f32.mrb[0].mxu0
    %2258 = vdwg.mxu0
    %2259 = vmatprep.subr.bf16.mxu0 %v1732
    %2260 = vmatpush1.bf16.msra.mxu0 %v1731
    %2261 = vmatprep.subr.bf16.mxu0 %v1739
    %2262 = vmatpush1.bf16.msra.mxu0 %v1738
    %2263 = vmatprep.subr.bf16.mxu0 %v1746
    %2264 = vmatpush1.bf16.msra.mxu0 %v1745
    %2265 = vmatprep.subr.bf16.mxu0 %v1753
    %2266 = vmatpush1.bf16.msra.mxu0 %v1752
    %2267 = vmatprep.subr.bf16.mxu0 %v1760
    %2268 = vmatpush1.bf16.msra.mxu0 %v1759
    %2269 = vmatprep.subr.bf16.mxu0 %v1767
    %2270 = vmatpush1.bf16.msra.mxu0 %v1766
    %2271 = vmatprep.subr.bf16.mxu0 %v1774
    %2272 = vmatpush1.bf16.msra.mxu0 %v1773
    %2273 = vmatprep.subr.bf16.mxu0 %v1781
    %2274 = vmatpush1.bf16.msra.mxu0 %v1780
    %2275 = vmatprep.subr.bf16.mxu0 %v1788
    %2276 = vmatpush1.bf16.msra.mxu0 %v1787
    %2277 = vmatprep.subr.bf16.mxu0 %v1795
    %2278 = vmatpush1.bf16.msra.mxu0 %v1794
    %2279 = vmatprep.subr.bf16.mxu0 %v1802
    %2280 = vmatpush1.bf16.msra.mxu0 %v1801
    %2281 = vmatprep.subr.bf16.mxu0 %v1809
    %2282 = vmatpush1.bf16.msra.mxu0 %v1808
    %2283 = vmatprep.subr.bf16.mxu0 %v1816
    %2284 = vmatpush1.bf16.msra.mxu0 %v1815
    %2285 = vmatprep.subr.bf16.mxu0 %v1823
    %2286 = vmatpush1.bf16.msra.mxu0 %v1822
    %2287 = vmatprep.subr.bf16.mxu0 %v1830
    %2288 = vmatpush1.bf16.msra.mxu0 %v1829
    %2289 = vmatprep.subr.bf16.mxu0 %v1837
    %2290 = vmatpush1.bf16.msra.mxu0 %v1836
    %2291 = vmatprep.mubr.bf16.mxu0 %v729
    %2292 = vmatmul.mubr.bf16.gmra.mrb[0].mxu0 %v728
    %v2293 = vpop.f32.mrb[0].mxu0
    %v2294 = vadd.f32 %v1001, %v2293
    %v2295 = vpop.f32.mrb[0].mxu0
    %v2296 = vadd.f32 %v1005, %v2295
    %v2297 = vpop.f32.mrb[0].mxu0
    %v2298 = vpop.f32.mrb[0].mxu0
    %2299 = vdwg.mxu0
    %2300 = vmatprep.subr.bf16.mxu0 %v1844
    %2301 = vmatpush1.bf16.msra.mxu0 %v1843
    %2302 = vmatprep.subr.bf16.mxu0 %v1851
    %2303 = vmatpush1.bf16.msra.mxu0 %v1850
    %2304 = vmatprep.subr.bf16.mxu0 %v1858
    %2305 = vmatpush1.bf16.msra.mxu0 %v1857
    %2306 = vmatprep.subr.bf16.mxu0 %v1865
    %2307 = vmatpush1.bf16.msra.mxu0 %v1864
    %2308 = vmatprep.subr.bf16.mxu0 %v1872
    %2309 = vmatpush1.bf16.msra.mxu0 %v1871
    %2310 = vmatprep.subr.bf16.mxu0 %v1879
    %2311 = vmatpush1.bf16.msra.mxu0 %v1878
    %2312 = vmatprep.subr.bf16.mxu0 %v1886
    %2313 = vmatpush1.bf16.msra.mxu0 %v1885
    %2314 = vmatprep.subr.bf16.mxu0 %v1893
    %2315 = vmatpush1.bf16.msra.mxu0 %v1892
    %2316 = vmatprep.subr.bf16.mxu0 %v1900
    %2317 = vmatpush1.bf16.msra.mxu0 %v1899
    %2318 = vmatprep.subr.bf16.mxu0 %v1907
    %2319 = vmatpush1.bf16.msra.mxu0 %v1906
    %2320 = vmatprep.subr.bf16.mxu0 %v1914
    %2321 = vmatpush1.bf16.msra.mxu0 %v1913
    %2322 = vmatprep.subr.bf16.mxu0 %v1921
    %2323 = vmatpush1.bf16.msra.mxu0 %v1920
    %2324 = vmatprep.subr.bf16.mxu0 %v1928
    %2325 = vmatpush1.bf16.msra.mxu0 %v1927
    %2326 = vmatprep.subr.bf16.mxu0 %v1935
    %2327 = vmatpush1.bf16.msra.mxu0 %v1934
    %2328 = vmatprep.subr.bf16.mxu0 %v1942
    %2329 = vmatpush1.bf16.msra.mxu0 %v1941
    %2330 = vmatprep.subr.bf16.mxu0 %v1949
    %2331 = vmatpush1.bf16.msra.mxu0 %v1948
    %2332 = vmatprep.mubr.bf16.mxu0 %v731
    %2333 = vmatmul.mubr.bf16.gmra.mrb[0].mxu0 %v730
    %v2334 = vpop.f32.mrb[0].mxu0
    %v2335 = vadd.f32 %v2294, %v2334
    %v2336 = vpop.f32.mrb[0].mxu0
    %v2337 = vadd.f32 %v2296, %v2336
    %v2338 = vpop.f32.mrb[0].mxu0
    %v2339 = vpop.f32.mrb[0].mxu0
    %2340 = vdwg.mxu0
    %2341 = vmatprep.subr.bf16.mxu0 %v1734
    %2342 = vmatpush1.bf16.msra.mxu0 %v1733
    %2343 = vmatprep.subr.bf16.mxu0 %v1741
    %2344 = vmatpush1.bf16.msra.mxu0 %v1740
    %2345 = vmatprep.subr.bf16.mxu0 %v1748
    %2346 = vmatpush1.bf16.msra.mxu0 %v1747
    %2347 = vmatprep.subr.bf16.mxu0 %v1755
    %2348 = vmatpush1.bf16.msra.mxu0 %v1754
    %2349 = vmatprep.subr.bf16.mxu0 %v1762
    %2350 = vmatpush1.bf16.msra.mxu0 %v1761
    %2351 = vmatprep.subr.bf16.mxu0 %v1769
    %2352 = vmatpush1.bf16.msra.mxu0 %v1768
    %2353 = vmatprep.subr.bf16.mxu0 %v1776
    %2354 = vmatpush1.bf16.msra.mxu0 %v1775
    %2355 = vmatprep.subr.bf16.mxu0 %v1783
    %2356 = vmatpush1.bf16.msra.mxu0 %v1782
    %2357 = vmatprep.subr.bf16.mxu0 %v1790
    %2358 = vmatpush1.bf16.msra.mxu0 %v1789
    %2359 = vmatprep.subr.bf16.mxu0 %v1797
    %2360 = vmatpush1.bf16.msra.mxu0 %v1796
    %2361 = vmatprep.subr.bf16.mxu0 %v1804
    %2362 = vmatpush1.bf16.msra.mxu0 %v1803
    %2363 = vmatprep.subr.bf16.mxu0 %v1811
    %2364 = vmatpush1.bf16.msra.mxu0 %v1810
    %2365 = vmatprep.subr.bf16.mxu0 %v1818
    %2366 = vmatpush1.bf16.msra.mxu0 %v1817
    %2367 = vmatprep.subr.bf16.mxu0 %v1825
    %2368 = vmatpush1.bf16.msra.mxu0 %v1824
    %2369 = vmatprep.subr.bf16.mxu0 %v1832
    %2370 = vmatpush1.bf16.msra.mxu0 %v1831
    %2371 = vmatprep.subr.bf16.mxu0 %v1839
    %2372 = vmatpush1.bf16.msra.mxu0 %v1838
    %2373 = vmatprep.mubr.bf16.mxu0 %v729
    %2374 = vmatmul.mubr.bf16.gmra.mrb[0].mxu0 %v728
    %v2375 = vpop.f32.mrb[0].mxu0
    %v2376 = vadd.f32 %v1009, %v2375
    %v2377 = vpop.f32.mrb[0].mxu0
    %v2378 = vadd.f32 %v1013, %v2377
    %v2379 = vpop.f32.mrb[0].mxu0
    %v2380 = vpop.f32.mrb[0].mxu0
    %2381 = vdwg.mxu0
    %2382 = vmatprep.subr.bf16.mxu0 %v1846
    %2383 = vmatpush1.bf16.msra.mxu0 %v1845
    %2384 = vmatprep.subr.bf16.mxu0 %v1853
    %2385 = vmatpush1.bf16.msra.mxu0 %v1852
    %2386 = vmatprep.subr.bf16.mxu0 %v1860
    %2387 = vmatpush1.bf16.msra.mxu0 %v1859
    %2388 = vmatprep.subr.bf16.mxu0 %v1867
    %2389 = vmatpush1.bf16.msra.mxu0 %v1866
    %2390 = vmatprep.subr.bf16.mxu0 %v1874
    %2391 = vmatpush1.bf16.msra.mxu0 %v1873
    %2392 = vmatprep.subr.bf16.mxu0 %v1881
    %2393 = vmatpush1.bf16.msra.mxu0 %v1880
    %2394 = vmatprep.subr.bf16.mxu0 %v1888
    %2395 = vmatpush1.bf16.msra.mxu0 %v1887
    %2396 = vmatprep.subr.bf16.mxu0 %v1895
    %2397 = vmatpush1.bf16.msra.mxu0 %v1894
    %2398 = vmatprep.subr.bf16.mxu0 %v1902
    %2399 = vmatpush1.bf16.msra.mxu0 %v1901
    %2400 = vmatprep.subr.bf16.mxu0 %v1909
    %2401 = vmatpush1.bf16.msra.mxu0 %v1908
    %2402 = vmatprep.subr.bf16.mxu0 %v1916
    %2403 = vmatpush1.bf16.msra.mxu0 %v1915
    %2404 = vmatprep.subr.bf16.mxu0 %v1923
    %2405 = vmatpush1.bf16.msra.mxu0 %v1922
    %2406 = vmatprep.subr.bf16.mxu0 %v1930
    %2407 = vmatpush1.bf16.msra.mxu0 %v1929
    %2408 = vmatprep.subr.bf16.mxu0 %v1937
    %2409 = vmatpush1.bf16.msra.mxu0 %v1936
    %2410 = vmatprep.subr.bf16.mxu0 %v1944
    %2411 = vmatpush1.bf16.msra.mxu0 %v1943
    %2412 = vmatprep.subr.bf16.mxu0 %v1951
    %2413 = vmatpush1.bf16.msra.mxu0 %v1950
    %2414 = vmatprep.mubr.bf16.mxu0 %v731
    %2415 = vmatmul.mubr.bf16.gmra.mrb[0].mxu0 %v730
    %v2416 = vpop.f32.mrb[0].mxu0
    %v2417 = vadd.f32 %v2376, %v2416
    %v2418 = vpop.f32.mrb[0].mxu0
    %v2419 = vadd.f32 %v2378, %v2418
    %v2420 = vpop.f32.mrb[0].mxu0
    %v2421 = vpop.f32.mrb[0].mxu0
    %2422 = vdwg.mxu0
    %2423 = vmatprep.subr.bf16.mxu0 0
    %2424 = vmatpush1.bf16.msra.mxu0 %v1735
    %2425 = vmatprep.subr.bf16.mxu0 0
    %2426 = vmatpush1.bf16.msra.mxu0 %v1742
    %2427 = vmatprep.subr.bf16.mxu0 0
    %2428 = vmatpush1.bf16.msra.mxu0 %v1749
    %2429 = vmatprep.subr.bf16.mxu0 0
    %2430 = vmatpush1.bf16.msra.mxu0 %v1756
    %2431 = vmatprep.subr.bf16.mxu0 0
    %2432 = vmatpush1.bf16.msra.mxu0 %v1763
    %2433 = vmatprep.subr.bf16.mxu0 0
    %2434 = vmatpush1.bf16.msra.mxu0 %v1770
    %2435 = vmatprep.subr.bf16.mxu0 0
    %2436 = vmatpush1.bf16.msra.mxu0 %v1777
    %2437 = vmatprep.subr.bf16.mxu0 0
    %2438 = vmatpush1.bf16.msra.mxu0 %v1784
    %2439 = vmatprep.subr.bf16.mxu0 0
    %2440 = vmatpush1.bf16.msra.mxu0 %v1791
    %2441 = vmatprep.subr.bf16.mxu0 0
    %2442 = vmatpush1.bf16.msra.mxu0 %v1798
    %2443 = vmatprep.subr.bf16.mxu0 0
    %2444 = vmatpush1.bf16.msra.mxu0 %v1805
    %2445 = vmatprep.subr.bf16.mxu0 0
    %2446 = vmatpush1.bf16.msra.mxu0 %v1812
    %2447 = vmatprep.subr.bf16.mxu0 0
    %2448 = vmatpush1.bf16.msra.mxu0 %v1819
    %2449 = vmatprep.subr.bf16.mxu0 0
    %2450 = vmatpush1.bf16.msra.mxu0 %v1826
    %2451 = vmatprep.subr.bf16.mxu0 0
    %2452 = vmatpush1.bf16.msra.mxu0 %v1833
    %2453 = vmatprep.subr.bf16.mxu0 0
    %2454 = vmatpush1.bf16.msra.mxu0 %v1840
    %2455 = vmatprep.mubr.bf16.mxu0 %v729
    %2456 = vmatmul.mubr.bf16.gmra.mrb[0].mxu0 %v728
    %v2457 = vpop.f32.mrb[0].mxu0
    %v2458 = vadd.f32 %v1017, %v2457
    %v2459 = vpop.f32.mrb[0].mxu0
    %v2460 = vpop.f32.mrb[0].mxu0
    %v2461 = vpop.f32.mrb[0].mxu0
    %2462 = vdwg.mxu0
    %2463 = vmatprep.subr.bf16.mxu0 0
    %2464 = vmatpush1.bf16.msra.mxu0 %v1847
    %2465 = vmatprep.subr.bf16.mxu0 0
    %2466 = vmatpush1.bf16.msra.mxu0 %v1854
    %2467 = vmatprep.subr.bf16.mxu0 0
    %2468 = vmatpush1.bf16.msra.mxu0 %v1861
    %2469 = vmatprep.subr.bf16.mxu0 0
    %2470 = vmatpush1.bf16.msra.mxu0 %v1868
    %2471 = vmatprep.subr.bf16.mxu0 0
    %2472 = vmatpush1.bf16.msra.mxu0 %v1875
    %2473 = vmatprep.subr.bf16.mxu0 0
    %2474 = vmatpush1.bf16.msra.mxu0 %v1882
    %2475 = vmatprep.subr.bf16.mxu0 0
    %2476 = vmatpush1.bf16.msra.mxu0 %v1889
    %2477 = vmatprep.subr.bf16.mxu0 0
    %2478 = vmatpush1.bf16.msra.mxu0 %v1896
    %2479 = vmatprep.subr.bf16.mxu0 0
    %2480 = vmatpush1.bf16.msra.mxu0 %v1903
    %2481 = vmatprep.subr.bf16.mxu0 0
    %2482 = vmatpush1.bf16.msra.mxu0 %v1910
    %2483 = vmatprep.subr.bf16.mxu0 0
    %2484 = vmatpush1.bf16.msra.mxu0 %v1917
    %2485 = vmatprep.subr.bf16.mxu0 0
    %2486 = vmatpush1.bf16.msra.mxu0 %v1924
    %2487 = vmatprep.subr.bf16.mxu0 0
    %2488 = vmatpush1.bf16.msra.mxu0 %v1931
    %2489 = vmatprep.subr.bf16.mxu0 0
    %2490 = vmatpush1.bf16.msra.mxu0 %v1938
    %2491 = vmatprep.subr.bf16.mxu0 0
    %2492 = vmatpush1.bf16.msra.mxu0 %v1945
    %2493 = vmatprep.subr.bf16.mxu0 0
    %2494 = vmatpush1.bf16.msra.mxu0 %v1952
    %2495 = vmatprep.mubr.bf16.mxu0 %v731
    %2496 = vmatmul.mubr.bf16.gmra.mrb[0].mxu0 %v730
    %v2497 = vpop.f32.mrb[0].mxu0
    %v2498 = vadd.f32 %v2458, %v2497
    %v2499 = vpop.f32.mrb[0].mxu0
    %v2500 = vpop.f32.mrb[0].mxu0
    %v2501 = vpop.f32.mrb[0].mxu0
    %2502 = vdwg.mxu0
    %v2503 = vtanh.pop %v2253
    %v2504 = vtanh.pop %v2255
    %v2505 = vtanh.pop %v2335
    %v2506 = vtanh.pop %v2337
    %v2507 = vtanh.pop %v2417
    %v2508 = vtanh.pop %v2419
    %v2509 = vtanh.pop %v2498
    %2510 = vst [vmem:[#allocation10] sm:$0xff] %v2503
    %2511 = vst [vmem:[#allocation10 + $0x8] sm:$0xff] %v2504
    %2512 = vst [vmem:[#allocation10 + $0x10] sm:$0xff] %v2505
    %2513 = vst [vmem:[#allocation10 + $0x18] sm:$0xff] %v2506
    %2514 = vst [vmem:[#allocation10 + $0x20] sm:$0xff] %v2507
    %2515 = vst [vmem:[#allocation10 + $0x28] sm:$0xff] %v2508
    %2516 = vst [vmem:[#allocation10 + $0x30] sm:$0xff] %v2509
    // Predicated region
    $region46: #{tpu_custom_call.1} parent=1 // pred_check
      _
    $region47: #{tpu_custom_call.1} parent=1 // pred_check_branch
      %2518 = sbr.rel (0) target = $region49
    $region48: #{tpu_custom_call.1} parent=1 // pred_region
      %s2520 = ssub.s32 896, 896
      %2521 = vsyncadd [#allocation4], %s2520
      %s2523 = sshll.u32 [#allocation10], 4
      %s2524 = int_to_ptr.vmem [resolvable:$true] %s2523
      %2526 = dma.vmem_to_hbm [thread:$0]  %s2524, 896, %s7, [#allocation4]
    $region49: #{tpu_custom_call.1} parent=1 // pred_fallthru
      _
    // Predicated region
    $region50: #{tpu_custom_call.1} parent=1 // pred_check
      _
    $region51: #{tpu_custom_call.1} parent=1 // pred_check_branch
      %2528 = sbr.rel (0) target = $region53
    $region52: #{tpu_custom_call.1} parent=1 // pred_region
      %2529 = dma.done [#allocation4], 896
    $region53: #{tpu_custom_call.1} parent=1 // pred_fallthru
      _
    %2530 = vsyncpa [#allocation3], 1
    %2531 = vsyncpa [#allocation6], 1
    %2532 = vsyncpa [#allocation9], 1
    %2533 = vsyncpa [#allocation4], 1

</llo_original>
